<compile_context>
chip_gen: v6e
topology: v6e:2x2x1
jax: 0.10.0
libtpu: 0.0.40
codegen_flags: <defaults>
</compile_context>

<pallas_src>
import functools

import jax
import jax.numpy as jnp
from jax.experimental import pallas as pl
from jax.experimental.pallas import tpu as pltpu


def _round_up(n, m):
    return ((n + m - 1) // m) * m


# ----------------------------------------------------------------------------
# Fused Pallas kernel: entire forward pass in one call
# ----------------------------------------------------------------------------
def _fused_model_kernel(x_ref, bias_ref, stats_ref, w_ref, v_ref, o_ref, qkv_ref, *,
                        B, S, H, NH, n_layer, Ds, OUT_PAD, eps,
                        stats_layout, lw_row0, fuse_top_row, fuse_bot_row,
                        stats_b_row, glob_row, l_off, g_off):
    BS = B * S
    Dh = H // NH
    scale = 1.0 / (Dh ** 0.5)
    bf16 = jnp.bfloat16
    f32 = jnp.float32
    LN1G, LN1B, LN2G, LN2B, APB, FPB, ATTNB, FCB = l_off
    GLNG, GLNB, GPB = g_off

    def ln(x, g, b):
        mean = jnp.mean(x, axis=-1, keepdims=True)
        var = jnp.mean(jnp.square(x - mean), axis=-1, keepdims=True)
        return (x - mean) * jax.lax.rsqrt(var + eps) * g + b

    # ---- StatsEncoder MLP (Linear+ReLU ... final Linear), bf16 W / f32 acc ----
    hstats = stats_ref[...]                                   # (B, Din) f32
    n_stats = len(stats_layout)
    for i, (r0, din, dout, boff) in enumerate(stats_layout):
        w = w_ref[r0:r0 + din, 0:dout]                        # bf16 (din, dout)
        b = v_ref[stats_b_row:stats_b_row + 1, boff:boff + dout]
        hstats = jnp.dot(hstats.astype(bf16), w, preferred_element_type=f32) + b
        if i < n_stats - 1:
            hstats = jnp.maximum(hstats, 0.0)
    # hstats: (B, Ds) f32

    # ---- attention bias (block-diag & causal & key-padding), loaded ONCE ----
    attn_bias = bias_ref[...]                                 # (BS, BS) f32

    # ---- tiny GPT-2 transformer stack ----
    h = x_ref[...]                                            # (BS, H) f32
    for l in range(n_layer):
        r0 = lw_row0 + l * H

        # --- attention block ---
        a_in = ln(h,
                  v_ref[l:l + 1, LN1G:LN1G + H],
                  v_ref[l:l + 1, LN1B:LN1B + H])
        qkv = jnp.dot(a_in.astype(bf16), w_ref[r0:r0 + H, 0:3 * H],
                      preferred_element_type=f32)
        qkv_ref[...] = qkv + v_ref[l:l + 1, ATTNB:ATTNB + 3 * H]

        acc = jnp.zeros((BS, H), f32)
        for hd in range(NH):
            q = qkv_ref[:, hd * Dh:(hd + 1) * Dh]             # static ref slices
            k = qkv_ref[:, H + hd * Dh:H + (hd + 1) * Dh]
            v = qkv_ref[:, 2 * H + hd * Dh:2 * H + (hd + 1) * Dh]
            s = jax.lax.dot_general(q, k, (((1,), (1,)), ((), ())),
                                    preferred_element_type=f32) * scale
            s = s + attn_bias                                 # single VPU add
            m = jnp.max(s, axis=-1, keepdims=True)
            p = jnp.exp(s - m)
            p = p * pl.reciprocal(jnp.sum(p, axis=-1, keepdims=True), approx=True)
            ctx = jnp.dot(p, v, preferred_element_type=f32)   # (BS, Dh)
            # fold head-concat into the output projection
            wp = w_ref[r0 + hd * Dh:r0 + (hd + 1) * Dh, 3 * H:4 * H]   # (Dh, H)
            acc = acc + jnp.dot(ctx.astype(bf16), wp, preferred_element_type=f32)
        h = h + acc + v_ref[l:l + 1, APB:APB + H]             # residual (fused)

        # --- MLP block ---
        m_in = ln(h,
                  v_ref[l:l + 1, LN2G:LN2G + H],
                  v_ref[l:l + 1, LN2B:LN2B + H])
        ff = jnp.dot(m_in.astype(bf16), w_ref[r0:r0 + H, 4 * H:8 * H],
                     preferred_element_type=f32) + v_ref[l:l + 1, FCB:FCB + 4 * H]
        ff = jax.nn.gelu(ff, approximate=True)                # GPT-2 "gelu_new"
        # fc_proj weight stored transposed -> contract on shared 4H dim (A @ B^T)
        ff = jax.lax.dot_general(ff.astype(bf16), w_ref[r0:r0 + H, 8 * H:12 * H],
                                 (((1,), (1,)), ((), ())),
                                 preferred_element_type=f32)
        h = h + ff + v_ref[l:l + 1, FPB:FPB + H]              # residual (fused)

    # ---- final LayerNorm -> last_hidden_state ----
    h = ln(h,
           v_ref[glob_row:glob_row + 1, GLNG:GLNG + H],
           v_ref[glob_row:glob_row + 1, GLNB:GLNB + H])

    # ---- concat-fusion projection as split matmul (lane-dense padded N) ----
    #   concat([tok, stats]) @ W + b == tok @ W_top + stats @ W_bot + b
    tok = jnp.dot(h.astype(bf16),
                  w_ref[fuse_top_row:fuse_top_row + H, 0:OUT_PAD],
                  preferred_element_type=f32) \
        + v_ref[glob_row:glob_row + 1, GPB:GPB + OUT_PAD]     # (BS, OUT_PAD)
    stp = jnp.dot(hstats.astype(bf16),
                  w_ref[fuse_bot_row:fuse_bot_row + Ds, 0:OUT_PAD],
                  preferred_element_type=f32)                 # (B, OUT_PAD)
    # single full-tile store (S aligns with the sublane tile)
    o_ref[...] = (tok.reshape(B, S, OUT_PAD) + stp[:, None, :]).reshape(BS, OUT_PAD)


# ----------------------------------------------------------------------------
# Parameter construction (deterministic)
# ----------------------------------------------------------------------------
def _normal(key, shape, scale=0.02):
    return scale * jax.random.normal(key, shape, dtype=jnp.float32)


def init_params(key, stats_input_dim, stats_hidden_dims, stats_output_dim,
                hidden_size, n_head, n_layer, vocab_size, max_pos):
    keys = iter(jax.random.split(key, 256))
    p = {}

    # StatsEncoder MLP: input -> hidden_dims (ReLU) -> output
    dims = [stats_input_dim] + list(stats_hidden_dims) + [stats_output_dim]
    p["stats"] = [
        {"w": _normal(next(keys), (dims[i], dims[i + 1])),
         "b": jnp.zeros((dims[i + 1],), jnp.float32)}
        for i in range(len(dims) - 1)
    ]

    # Tiny GPT-2
    # TODO(synk): pretrained GPT-2 weights cannot be loaded in-script; using a
    # deterministic random-initialized tiny GPT-2 with identical structure.
    p["wte"] = _normal(next(keys), (vocab_size, hidden_size))
    p["wpe"] = _normal(next(keys), (max_pos, hidden_size))
    p["layers"] = []
    for _ in range(n_layer):
        lyr = {
            "ln1_g": jnp.ones((hidden_size,), jnp.float32),
            "ln1_b": jnp.zeros((hidden_size,), jnp.float32),
            "attn_w": _normal(next(keys), (hidden_size, 3 * hidden_size)),
            "attn_b": jnp.zeros((3 * hidden_size,), jnp.float32),
            "attn_proj_w": _normal(next(keys), (hidden_size, hidden_size)),
            "attn_proj_b": jnp.zeros((hidden_size,), jnp.float32),
            "ln2_g": jnp.ones((hidden_size,), jnp.float32),
            "ln2_b": jnp.zeros((hidden_size,), jnp.float32),
            "fc_w": _normal(next(keys), (hidden_size, 4 * hidden_size)),
            "fc_b": jnp.zeros((4 * hidden_size,), jnp.float32),
            "fc_proj_w": _normal(next(keys), (4 * hidden_size, hidden_size)),
            "fc_proj_b": jnp.zeros((hidden_size,), jnp.float32),
        }
        p["layers"].append(lyr)
    p["lnf_g"] = jnp.ones((hidden_size,), jnp.float32)
    p["lnf_b"] = jnp.zeros((hidden_size,), jnp.float32)

    # fusion proj (concat): Linear(hidden + stats_output_dim, hidden)
    p["proj_w"] = _normal(next(keys), (hidden_size + stats_output_dim, hidden_size))
    p["proj_b"] = jnp.zeros((hidden_size,), jnp.float32)

    p["config"] = dict(hidden_size=hidden_size, n_head=n_head, n_layer=n_layer)
    return p


# ----------------------------------------------------------------------------
# Forward pass (single fused pallas_call, 5 packed operands)
# ----------------------------------------------------------------------------
def game_stats2text_forward(params, stats, input_ids, attention_mask):
    """fusion_method == 'concat'"""
    cfg = params["config"]
    H, NH, n_layer = cfg["hidden_size"], cfg["n_head"], cfg["n_layer"]
    B, S = input_ids.shape
    BS = B * S
    Ds = params["proj_w"].shape[0] - H
    OUT_PAD = _round_up(max(H, 128), 128)
    eps = 1e-5

    # ---- embedding gather (plain JAX glue) ----
    # TODO(synk): data-dependent embedding gather stays outside the kernel.
    pos = jnp.arange(S)
    x = (params["wte"][input_ids] + params["wpe"][pos][None, :, :]) \
        .reshape(BS, H).astype(jnp.float32)

    # ---- precomputed additive attention bias: batch-block & causal & padding ----
    ridx = jnp.arange(BS)[:, None]
    cidx = jnp.arange(BS)[None, :]
    allowed = ((ridx // S) == (cidx // S)) & (cidx <= ridx) \
        & (attention_mask.reshape(1, BS) > 0)
    attn_bias = jnp.where(allowed, 0.0, -1e30).astype(jnp.float32)

    # ---- pack ALL weight matrices into one bf16 array (single DMA) ----
    stats_dims = [(l["w"].shape[0], l["w"].shape[1]) for l in params["stats"]]
    WCOLS = max(12 * H, OUT_PAD, max(dout for _, dout in stats_dims))

    def pad_cols(m):
        m = m.astype(jnp.bfloat16)
        return jnp.pad(m, ((0, 0), (0, WCOLS - m.shape[1])))

    b_offs, boff = [], 0
    for (_, dout) in stats_dims:
        b_offs.append(boff)
        boff += _round_up(dout, 128)

    w_blocks, stats_layout, row = [], [], 0
    for i, lyr in enumerate(params["stats"]):
        din, dout = stats_dims[i]
        stats_layout.append((row, din, dout, b_offs[i]))
        w_blocks.append(pad_cols(lyr["w"]))
        row += din
    lw_row0 = row
    for lyr in params["layers"]:
        blk = jnp.concatenate(
            [lyr["attn_w"], lyr["attn_proj_w"], lyr["fc_w"], lyr["fc_proj_w"].T],
            axis=1)
        w_blocks.append(pad_cols(blk))
        row += H
    fuse_top_row = row
    w_blocks.append(pad_cols(params["proj_w"][:H, :]))    # W_top (H, H), zero-padded N
    row += H
    fuse_bot_row = row
    w_blocks.append(pad_cols(params["proj_w"][H:, :]))    # W_bot (Ds, H), zero-padded N
    row += Ds
    W = jnp.concatenate(w_blocks, axis=0)

    # ---- pack ALL bias / LayerNorm vectors into one f32 array (single DMA) ----
    layer_fields = [H, H, H, H, H, H, 3 * H, 4 * H]       # ln1_g,ln1_b,ln2_g,ln2_b,apb,fpb,attn_b,fc_b
    l_off, c = [], 0
    for n in layer_fields:
        l_off.append(c)
        c += _round_up(n, 128)
    layer_cols = c
    g_off = (0, _round_up(H, 128), 2 * _round_up(H, 128))  # lnf_g, lnf_b, proj_b
    glob_cols = g_off[2] + _round_up(OUT_PAD, 128)
    stats_cols = b_offs[-1] + _round_up(stats_dims[-1][1], 128)
    VCOLS = max(layer_cols, glob_cols, stats_cols)

    def vecrow(pieces):
        rowv = jnp.zeros((VCOLS,), jnp.float32)
        for arr, off in pieces:
            a = jnp.asarray(arr, jnp.float32).reshape(-1)
            rowv = rowv.at[off:off + a.shape[0]].set(a)
        return rowv[None, :]

    v_rows = []
    for lyr in params["layers"]:
        v_rows.append(vecrow([
            (lyr["ln1_g"], l_off[0]), (lyr["ln1_b"], l_off[1]),
            (lyr["ln2_g"], l_off[2]), (lyr["ln2_b"], l_off[3]),
            (lyr["attn_proj_b"], l_off[4]), (lyr["fc_proj_b"], l_off[5]),
            (lyr["attn_b"], l_off[6]), (lyr["fc_b"], l_off[7])]))
    v_rows.append(vecrow(
        [(params["stats"][i]["b"], b_offs[i]) for i in range(len(stats_dims))]))
    v_rows.append(vecrow([(params["lnf_g"], g_off[0]),
                          (params["lnf_b"], g_off[1]),
                          (params["proj_b"], g_off[2])]))
    V = jnp.concatenate(v_rows, axis=0)
    stats_b_row = n_layer
    glob_row = n_layer + 1

    kernel = functools.partial(
        _fused_model_kernel,
        B=B, S=S, H=H, NH=NH, n_layer=n_layer, Ds=Ds, OUT_PAD=OUT_PAD, eps=eps,
        stats_layout=tuple(stats_layout), lw_row0=lw_row0,
        fuse_top_row=fuse_top_row, fuse_bot_row=fuse_bot_row,
        stats_b_row=stats_b_row, glob_row=glob_row,
        l_off=tuple(l_off), g_off=g_off)

    # TODO(synk): when scaling to the real pretrained GPT-2 (H=768, 12 layers),
    # move to a layer-streamed grid (BlockSpec over layers, bf16, Buffered(2),
    # vmem_limit_bytes) with a "parallel" batch/head axis for v7x's 2 TCs.
    out = pl.pallas_call(
        kernel,
        out_shape=jax.ShapeDtypeStruct((BS, OUT_PAD), jnp.float32),
        in_specs=[pl.BlockSpec(memory_space=pltpu.MemorySpace.VMEM)] * 5,
        out_specs=pl.BlockSpec(memory_space=pltpu.MemorySpace.VMEM),
        scratch_shapes=[pltpu.VMEM((BS, 3 * H), jnp.float32)],
    )(x, attn_bias, stats.astype(jnp.float32), W, V)
    return out[:, :H].reshape(B, S, H)


# ----------------------------------------------------------------------------
# Main
# ----------------------------------------------------------------------------
if __name__ == "__main__":
    key = jax.random.PRNGKey(0)
    k_param, k_stats, k_ids = jax.random.split(key, 3)

    # small config
    B, S = 2, 8
    STATS_IN, STATS_HIDDEN, STATS_OUT = 16, [128, 64], 32
    HIDDEN, N_HEAD, N_LAYER, VOCAB, MAX_POS = 32, 2, 2, 128, 32

    params = init_params(k_param, STATS_IN, STATS_HIDDEN, STATS_OUT,
                         HIDDEN, N_HEAD, N_LAYER, VOCAB, MAX_POS)

    stats = jax.random.normal(k_stats, (B, STATS_IN), dtype=jnp.float32)
    input_ids = jax.random.randint(k_ids, (B, S), 0, VOCAB, dtype=jnp.int32)
    attention_mask = jnp.ones((B, S), dtype=jnp.int32).at[1, -2:].set(0)  # some padding

    out = game_stats2text_forward(params, stats, input_ids, attention_mask)
    out = jax.block_until_ready(out)
    assert out.shape == (B, S, HIDDEN), out.shape
    assert jnp.all(jnp.isfinite(out))
    print("KERNEL_OK")
</pallas_src>

<mosaic_0001>
module attributes {stable_mosaic.version = 11 : i64} {
  func.func @_fused_model_kernel(%arg0: memref<16x32xf32, #tpu.memory_space<vmem>>, %arg1: memref<16x16xf32, #tpu.memory_space<vmem>>, %arg2: memref<2x16xf32, #tpu.memory_space<vmem>>, %arg3: memref<336x384xbf16, #tpu.memory_space<vmem>>, %arg4: memref<4x1024xf32, #tpu.memory_space<vmem>>, %arg5: memref<16x128xf32, #tpu.memory_space<vmem>>, %arg6: memref<16x96xf32, #tpu.memory_space<vmem>>) attributes {dimension_semantics = [], scalar_prefetch = 0 : i64, scratch_operands = 1 : i64, tpu.core_type = #tpu.core_type<tc>} {
    %c0 = arith.constant 0 : index
    %c0_0 = arith.constant 0 : index
    %0 = vector.load %arg2[%c0, %c0_0] : memref<2x16xf32, #tpu.memory_space<vmem>>, vector<2x16xf32>
    %c0_1 = arith.constant 0 : index
    %c0_2 = arith.constant 0 : index
    %1 = vector.load %arg3[%c0_1, %c0_2] : memref<336x384xbf16, #tpu.memory_space<vmem>>, vector<16x128xbf16>
    %c2 = arith.constant 2 : index
    %c0_3 = arith.constant 0 : index
    %2 = vector.load %arg4[%c2, %c0_3] : memref<4x1024xf32, #tpu.memory_space<vmem>>, vector<1x128xf32>
    %3 = arith.truncf %0 : vector<2x16xf32> to vector<2x16xbf16>
    %cst = arith.constant dense<0.000000e+00> : vector<2x128xf32>
    %4 = tpu.matmul %3, %1, %cst {dimension_numbers = #tpu.dot_dimension_numbers<[1], [0], [0], [1], [0, 0, 1, 1], [], []>} : vector<2x16xbf16>, vector<16x128xbf16>, vector<2x128xf32> -> vector<2x128xf32>
    %5 = vector.broadcast %2 : vector<1x128xf32> to vector<2x128xf32>
    %6 = arith.addf %4, %5 : vector<2x128xf32>
    %cst_4 = arith.constant 0.000000e+00 : f32
    %7 = vector.broadcast %cst_4 : f32 to vector<2x128xf32>
    %8 = arith.maximumf %6, %7 : vector<2x128xf32>
    %c16 = arith.constant 16 : index
    %c0_5 = arith.constant 0 : index
    %9 = vector.load %arg3[%c16, %c0_5] : memref<336x384xbf16, #tpu.memory_space<vmem>>, vector<128x64xbf16>
    %c2_6 = arith.constant 2 : index
    %c128 = arith.constant 128 : index
    %10 = vector.load %arg4[%c2_6, %c128] : memref<4x1024xf32, #tpu.memory_space<vmem>>, vector<1x64xf32>
    %11 = arith.truncf %8 : vector<2x128xf32> to vector<2x128xbf16>
    %cst_7 = arith.constant dense<0.000000e+00> : vector<2x64xf32>
    %12 = tpu.matmul %11, %9, %cst_7 {dimension_numbers = #tpu.dot_dimension_numbers<[1], [0], [0], [1], [0, 0, 1, 1], [], []>} : vector<2x128xbf16>, vector<128x64xbf16>, vector<2x64xf32> -> vector<2x64xf32>
    %13 = vector.broadcast %10 : vector<1x64xf32> to vector<2x64xf32>
    %14 = arith.addf %12, %13 : vector<2x64xf32>
    %cst_8 = arith.constant 0.000000e+00 : f32
    %15 = vector.broadcast %cst_8 : f32 to vector<2x64xf32>
    %16 = arith.maximumf %14, %15 : vector<2x64xf32>
    %c144 = arith.constant 144 : index
    %c0_9 = arith.constant 0 : index
    %17 = vector.load %arg3[%c144, %c0_9] : memref<336x384xbf16, #tpu.memory_space<vmem>>, vector<64x32xbf16>
    %c2_10 = arith.constant 2 : index
    %c256 = arith.constant 256 : index
    %18 = vector.load %arg4[%c2_10, %c256] : memref<4x1024xf32, #tpu.memory_space<vmem>>, vector<1x32xf32>
    %19 = arith.truncf %16 : vector<2x64xf32> to vector<2x64xbf16>
    %cst_11 = arith.constant dense<0.000000e+00> : vector<2x32xf32>
    %20 = tpu.matmul %19, %17, %cst_11 {dimension_numbers = #tpu.dot_dimension_numbers<[1], [0], [0], [1], [0, 0, 1, 1], [], []>} : vector<2x64xbf16>, vector<64x32xbf16>, vector<2x32xf32> -> vector<2x32xf32>
    %21 = vector.broadcast %18 : vector<1x32xf32> to vector<2x32xf32>
    %22 = arith.addf %20, %21 : vector<2x32xf32>
    %c0_12 = arith.constant 0 : index
    %c0_13 = arith.constant 0 : index
    %23 = vector.load %arg1[%c0_12, %c0_13] : memref<16x16xf32, #tpu.memory_space<vmem>>, vector<16x16xf32>
    %c0_14 = arith.constant 0 : index
    %c0_15 = arith.constant 0 : index
    %24 = vector.load %arg0[%c0_14, %c0_15] : memref<16x32xf32, #tpu.memory_space<vmem>>, vector<16x32xf32>
    %c0_16 = arith.constant 0 : index
    %c0_17 = arith.constant 0 : index
    %25 = vector.load %arg4[%c0_16, %c0_17] : memref<4x1024xf32, #tpu.memory_space<vmem>>, vector<1x32xf32>
    %c0_18 = arith.constant 0 : index
    %c128_19 = arith.constant 128 : index
    %26 = vector.load %arg4[%c0_18, %c128_19] : memref<4x1024xf32, #tpu.memory_space<vmem>>, vector<1x32xf32>
    %cst_20 = arith.constant dense<0.000000e+00> : vector<16xf32>
    %27 = vector.multi_reduction <add>, %24, %cst_20 [1] : vector<16x32xf32> to vector<16xf32>
    %28 = vector.shape_cast %27 : vector<16xf32> to vector<16x1xf32>
    %cst_21 = arith.constant 3.200000e+01 : f32
    %29 = vector.broadcast %cst_21 : f32 to vector<16x1xf32>
    %30 = arith.divf %28, %29 : vector<16x1xf32>
    %31 = vector.broadcast %30 : vector<16x1xf32> to vector<16x32xf32>
    %32 = arith.subf %24, %31 : vector<16x32xf32>
    %33 = arith.mulf %32, %32 : vector<16x32xf32>
    %cst_22 = arith.constant dense<0.000000e+00> : vector<16xf32>
    %34 = vector.multi_reduction <add>, %33, %cst_22 [1] : vector<16x32xf32> to vector<16xf32>
    %35 = vector.shape_cast %34 : vector<16xf32> to vector<16x1xf32>
    %cst_23 = arith.constant 3.200000e+01 : f32
    %36 = vector.broadcast %cst_23 : f32 to vector<16x1xf32>
    %37 = arith.divf %35, %36 : vector<16x1xf32>
    %38 = vector.broadcast %30 : vector<16x1xf32> to vector<16x32xf32>
    %39 = arith.subf %24, %38 : vector<16x32xf32>
    %cst_24 = arith.constant 9.99999974E-6 : f32
    %40 = vector.broadcast %cst_24 : f32 to vector<16x1xf32>
    %41 = arith.addf %37, %40 : vector<16x1xf32>
    %42 = math.rsqrt %41 : vector<16x1xf32>
    %43 = vector.broadcast %42 : vector<16x1xf32> to vector<16x32xf32>
    %44 = arith.mulf %39, %43 : vector<16x32xf32>
    %45 = vector.broadcast %25 : vector<1x32xf32> to vector<16x32xf32>
    %46 = arith.mulf %44, %45 : vector<16x32xf32>
    %47 = vector.broadcast %26 : vector<1x32xf32> to vector<16x32xf32>
    %48 = arith.addf %46, %47 : vector<16x32xf32>
    %49 = arith.truncf %48 : vector<16x32xf32> to vector<16x32xbf16>
    %c208 = arith.constant 208 : index
    %c0_25 = arith.constant 0 : index
    %50 = vector.load %arg3[%c208, %c0_25] : memref<336x384xbf16, #tpu.memory_space<vmem>>, vector<32x96xbf16>
    %cst_26 = arith.constant dense<0.000000e+00> : vector<16x96xf32>
    %51 = tpu.matmul %49, %50, %cst_26 {dimension_numbers = #tpu.dot_dimension_numbers<[1], [0], [0], [1], [0, 0, 1, 1], [], []>} : vector<16x32xbf16>, vector<32x96xbf16>, vector<16x96xf32> -> vector<16x96xf32>
    %c0_27 = arith.constant 0 : index
    %c768 = arith.constant 768 : index
    %52 = vector.load %arg4[%c0_27, %c768] : memref<4x1024xf32, #tpu.memory_space<vmem>>, vector<1x96xf32>
    %53 = vector.broadcast %52 : vector<1x96xf32> to vector<16x96xf32>
    %54 = arith.addf %51, %53 : vector<16x96xf32>
    %c0_28 = arith.constant 0 : index
    %c0_29 = arith.constant 0 : index
    %55 = vector.load %arg6[%c0_28, %c0_29] : memref<16x96xf32, #tpu.memory_space<vmem>>, vector<16x96xf32>
    tpu.vector_store %arg6[%c0_28, %c0_29], %54 {strides = array<i32>} : memref<16x96xf32, #tpu.memory_space<vmem>>, vector<16x96xf32>,
    %cst_30 = arith.constant 0.000000e+00 : f32
    %56 = vector.broadcast %cst_30 : f32 to vector<16x32xf32>
    %c0_31 = arith.constant 0 : index
    %c0_32 = arith.constant 0 : index
    %57 = vector.load %arg6[%c0_31, %c0_32] : memref<16x96xf32, #tpu.memory_space<vmem>>, vector<16x16xf32>
    %c0_33 = arith.constant 0 : index
    %c32 = arith.constant 32 : index
    %58 = vector.load %arg6[%c0_33, %c32] : memref<16x96xf32, #tpu.memory_space<vmem>>, vector<16x16xf32>
    %c0_34 = arith.constant 0 : index
    %c64 = arith.constant 64 : index
    %59 = vector.load %arg6[%c0_34, %c64] : memref<16x96xf32, #tpu.memory_space<vmem>>, vector<16x16xf32>
    %cst_35 = arith.constant dense<0.000000e+00> : vector<16x16xf32>
    %60 = tpu.matmul %57, %58, %cst_35 {dimension_numbers = #tpu.dot_dimension_numbers<[1], [1], [0], [0], [0, 0, 1, 0], [], []>} : vector<16x16xf32>, vector<16x16xf32>, vector<16x16xf32> -> vector<16x16xf32>
    %cst_36 = arith.constant 2.500000e-01 : f32
    %61 = vector.broadcast %cst_36 : f32 to vector<16x16xf32>
    %62 = arith.mulf %60, %61 : vector<16x16xf32>
    %63 = arith.addf %62, %23 : vector<16x16xf32>
    %cst_37 = arith.constant dense<0xFF800000> : vector<16xf32>
    %64 = vector.multi_reduction <maximumf>, %63, %cst_37 [1] : vector<16x16xf32> to vector<16xf32>
    %65 = vector.shape_cast %64 : vector<16xf32> to vector<16x1xf32>
    %66 = vector.broadcast %65 : vector<16x1xf32> to vector<16x16xf32>
    %67 = arith.subf %63, %66 : vector<16x16xf32>
    %68 = math.exp %67 : vector<16x16xf32>
    %cst_38 = arith.constant dense<0.000000e+00> : vector<16xf32>
    %69 = vector.multi_reduction <add>, %68, %cst_38 [1] : vector<16x16xf32> to vector<16xf32>
    %70 = vector.shape_cast %69 : vector<16xf32> to vector<16x1xf32>
    %71 = tpu.reciprocal %70 {approx = true} : vector<16x1xf32> -> vector<16x1xf32>
    %72 = vector.broadcast %71 : vector<16x1xf32> to vector<16x16xf32>
    %73 = arith.mulf %68, %72 : vector<16x16xf32>
    %cst_39 = arith.constant dense<0.000000e+00> : vector<16x16xf32>
    %74 = tpu.matmul %73, %59, %cst_39 {dimension_numbers = #tpu.dot_dimension_numbers<[1], [0], [0], [1], [0, 0, 1, 1], [], []>} : vector<16x16xf32>, vector<16x16xf32>, vector<16x16xf32> -> vector<16x16xf32>
    %c208_40 = arith.constant 208 : index
    %c96 = arith.constant 96 : index
    %75 = vector.load %arg3[%c208_40, %c96] : memref<336x384xbf16, #tpu.memory_space<vmem>>, vector<16x32xbf16>
    %76 = arith.truncf %74 : vector<16x16xf32> to vector<16x16xbf16>
    %cst_41 = arith.constant dense<0.000000e+00> : vector<16x32xf32>
    %77 = tpu.matmul %76, %75, %cst_41 {dimension_numbers = #tpu.dot_dimension_numbers<[1], [0], [0], [1], [0, 0, 1, 1], [], []>} : vector<16x16xbf16>, vector<16x32xbf16>, vector<16x32xf32> -> vector<16x32xf32>
    %78 = arith.addf %56, %77 : vector<16x32xf32>
    %c0_42 = arith.constant 0 : index
    %c16_43 = arith.constant 16 : index
    %79 = vector.load %arg6[%c0_42, %c16_43] : memref<16x96xf32, #tpu.memory_space<vmem>>, vector<16x16xf32>
    %c0_44 = arith.constant 0 : index
    %c48 = arith.constant 48 : index
    %80 = vector.load %arg6[%c0_44, %c48] : memref<16x96xf32, #tpu.memory_space<vmem>>, vector<16x16xf32>
    %c0_45 = arith.constant 0 : index
    %c80 = arith.constant 80 : index
    %81 = vector.load %arg6[%c0_45, %c80] : memref<16x96xf32, #tpu.memory_space<vmem>>, vector<16x16xf32>
    %cst_46 = arith.constant dense<0.000000e+00> : vector<16x16xf32>
    %82 = tpu.matmul %79, %80, %cst_46 {dimension_numbers = #tpu.dot_dimension_numbers<[1], [1], [0], [0], [0, 0, 1, 0], [], []>} : vector<16x16xf32>, vector<16x16xf32>, vector<16x16xf32> -> vector<16x16xf32>
    %cst_47 = arith.constant 2.500000e-01 : f32
    %83 = vector.broadcast %cst_47 : f32 to vector<16x16xf32>
    %84 = arith.mulf %82, %83 : vector<16x16xf32>
    %85 = arith.addf %84, %23 : vector<16x16xf32>
    %cst_48 = arith.constant dense<0xFF800000> : vector<16xf32>
    %86 = vector.multi_reduction <maximumf>, %85, %cst_48 [1] : vector<16x16xf32> to vector<16xf32>
    %87 = vector.shape_cast %86 : vector<16xf32> to vector<16x1xf32>
    %88 = vector.broadcast %87 : vector<16x1xf32> to vector<16x16xf32>
    %89 = arith.subf %85, %88 : vector<16x16xf32>
    %90 = math.exp %89 : vector<16x16xf32>
    %cst_49 = arith.constant dense<0.000000e+00> : vector<16xf32>
    %91 = vector.multi_reduction <add>, %90, %cst_49 [1] : vector<16x16xf32> to vector<16xf32>
    %92 = vector.shape_cast %91 : vector<16xf32> to vector<16x1xf32>
    %93 = tpu.reciprocal %92 {approx = true} : vector<16x1xf32> -> vector<16x1xf32>
    %94 = vector.broadcast %93 : vector<16x1xf32> to vector<16x16xf32>
    %95 = arith.mulf %90, %94 : vector<16x16xf32>
    %cst_50 = arith.constant dense<0.000000e+00> : vector<16x16xf32>
    %96 = tpu.matmul %95, %81, %cst_50 {dimension_numbers = #tpu.dot_dimension_numbers<[1], [0], [0], [1], [0, 0, 1, 1], [], []>} : vector<16x16xf32>, vector<16x16xf32>, vector<16x16xf32> -> vector<16x16xf32>
    %c224 = arith.constant 224 : index
    %c96_51 = arith.constant 96 : index
    %97 = vector.load %arg3[%c224, %c96_51] : memref<336x384xbf16, #tpu.memory_space<vmem>>, vector<16x32xbf16>
    %98 = arith.truncf %96 : vector<16x16xf32> to vector<16x16xbf16>
    %cst_52 = arith.constant dense<0.000000e+00> : vector<16x32xf32>
    %99 = tpu.matmul %98, %97, %cst_52 {dimension_numbers = #tpu.dot_dimension_numbers<[1], [0], [0], [1], [0, 0, 1, 1], [], []>} : vector<16x16xbf16>, vector<16x32xbf16>, vector<16x32xf32> -> vector<16x32xf32>
    %100 = arith.addf %78, %99 : vector<16x32xf32>
    %101 = arith.addf %24, %100 : vector<16x32xf32>
    %c0_53 = arith.constant 0 : index
    %c512 = arith.constant 512 : index
    %102 = vector.load %arg4[%c0_53, %c512] : memref<4x1024xf32, #tpu.memory_space<vmem>>, vector<1x32xf32>
    %103 = vector.broadcast %102 : vector<1x32xf32> to vector<16x32xf32>
    %104 = arith.addf %101, %103 : vector<16x32xf32>
    %c0_54 = arith.constant 0 : index
    %c256_55 = arith.constant 256 : index
    %105 = vector.load %arg4[%c0_54, %c256_55] : memref<4x1024xf32, #tpu.memory_space<vmem>>, vector<1x32xf32>
    %c0_56 = arith.constant 0 : index
    %c384 = arith.constant 384 : index
    %106 = vector.load %arg4[%c0_56, %c384] : memref<4x1024xf32, #tpu.memory_space<vmem>>, vector<1x32xf32>
    %cst_57 = arith.constant dense<0.000000e+00> : vector<16xf32>
    %107 = vector.multi_reduction <add>, %104, %cst_57 [1] : vector<16x32xf32> to vector<16xf32>
    %108 = vector.shape_cast %107 : vector<16xf32> to vector<16x1xf32>
    %cst_58 = arith.constant 3.200000e+01 : f32
    %109 = vector.broadcast %cst_58 : f32 to vector<16x1xf32>
    %110 = arith.divf %108, %109 : vector<16x1xf32>
    %111 = vector.broadcast %110 : vector<16x1xf32> to vector<16x32xf32>
    %112 = arith.subf %104, %111 : vector<16x32xf32>
    %113 = arith.mulf %112, %112 : vector<16x32xf32>
    %cst_59 = arith.constant dense<0.000000e+00> : vector<16xf32>
    %114 = vector.multi_reduction <add>, %113, %cst_59 [1] : vector<16x32xf32> to vector<16xf32>
    %115 = vector.shape_cast %114 : vector<16xf32> to vector<16x1xf32>
    %cst_60 = arith.constant 3.200000e+01 : f32
    %116 = vector.broadcast %cst_60 : f32 to vector<16x1xf32>
    %117 = arith.divf %115, %116 : vector<16x1xf32>
    %118 = vector.broadcast %110 : vector<16x1xf32> to vector<16x32xf32>
    %119 = arith.subf %104, %118 : vector<16x32xf32>
    %cst_61 = arith.constant 9.99999974E-6 : f32
    %120 = vector.broadcast %cst_61 : f32 to vector<16x1xf32>
    %121 = arith.addf %117, %120 : vector<16x1xf32>
    %122 = math.rsqrt %121 : vector<16x1xf32>
    %123 = vector.broadcast %122 : vector<16x1xf32> to vector<16x32xf32>
    %124 = arith.mulf %119, %123 : vector<16x32xf32>
    %125 = vector.broadcast %105 : vector<1x32xf32> to vector<16x32xf32>
    %126 = arith.mulf %124, %125 : vector<16x32xf32>
    %127 = vector.broadcast %106 : vector<1x32xf32> to vector<16x32xf32>
    %128 = arith.addf %126, %127 : vector<16x32xf32>
    %129 = arith.truncf %128 : vector<16x32xf32> to vector<16x32xbf16>
    %c208_62 = arith.constant 208 : index
    %c128_63 = arith.constant 128 : index
    %130 = vector.load %arg3[%c208_62, %c128_63] : memref<336x384xbf16, #tpu.memory_space<vmem>>, vector<32x128xbf16>
    %cst_64 = arith.constant dense<0.000000e+00> : vector<16x128xf32>
    %131 = tpu.matmul %129, %130, %cst_64 {dimension_numbers = #tpu.dot_dimension_numbers<[1], [0], [0], [1], [0, 0, 1, 1], [], []>} : vector<16x32xbf16>, vector<32x128xbf16>, vector<16x128xf32> -> vector<16x128xf32>
    %c0_65 = arith.constant 0 : index
    %c896 = arith.constant 896 : index
    %132 = vector.load %arg4[%c0_65, %c896] : memref<4x1024xf32, #tpu.memory_space<vmem>>, vector<1x128xf32>
    %133 = vector.broadcast %132 : vector<1x128xf32> to vector<16x128xf32>
    %134 = arith.addf %131, %133 : vector<16x128xf32>
    %135 = arith.mulf %134, %134 : vector<16x128xf32>
    %136 = arith.mulf %134, %135 : vector<16x128xf32>
    %cst_66 = arith.constant 4.471500e-02 : f32
    %137 = vector.broadcast %cst_66 : f32 to vector<16x128xf32>
    %138 = arith.mulf %137, %136 : vector<16x128xf32>
    %139 = arith.addf %134, %138 : vector<16x128xf32>
    %cst_67 = arith.constant 0.797884583 : f32
    %140 = vector.broadcast %cst_67 : f32 to vector<16x128xf32>
    %141 = arith.mulf %140, %139 : vector<16x128xf32>
    %142 = math.tanh %141 : vector<16x128xf32>
    %cst_68 = arith.constant 1.000000e+00 : f32
    %143 = vector.broadcast %cst_68 : f32 to vector<16x128xf32>
    %144 = arith.addf %143, %142 : vector<16x128xf32>
    %cst_69 = arith.constant 5.000000e-01 : f32
    %145 = vector.broadcast %cst_69 : f32 to vector<16x128xf32>
    %146 = arith.mulf %145, %144 : vector<16x128xf32>
    %147 = arith.mulf %134, %146 : vector<16x128xf32>
    %148 = arith.truncf %147 : vector<16x128xf32> to vector<16x128xbf16>
    %c208_70 = arith.constant 208 : index
    %c256_71 = arith.constant 256 : index
    %149 = vector.load %arg3[%c208_70, %c256_71] : memref<336x384xbf16, #tpu.memory_space<vmem>>, vector<32x128xbf16>
    %cst_72 = arith.constant dense<0.000000e+00> : vector<16x32xf32>
    %150 = tpu.matmul %148, %149, %cst_72 {dimension_numbers = #tpu.dot_dimension_numbers<[1], [1], [0], [0], [0, 0, 1, 0], [], []>} : vector<16x128xbf16>, vector<32x128xbf16>, vector<16x32xf32> -> vector<16x32xf32>
    %151 = arith.addf %104, %150 : vector<16x32xf32>
    %c0_73 = arith.constant 0 : index
    %c640 = arith.constant 640 : index
    %152 = vector.load %arg4[%c0_73, %c640] : memref<4x1024xf32, #tpu.memory_space<vmem>>, vector<1x32xf32>
    %153 = vector.broadcast %152 : vector<1x32xf32> to vector<16x32xf32>
    %154 = arith.addf %151, %153 : vector<16x32xf32>
    %c1 = arith.constant 1 : index
    %c0_74 = arith.constant 0 : index
    %155 = vector.load %arg4[%c1, %c0_74] : memref<4x1024xf32, #tpu.memory_space<vmem>>, vector<1x32xf32>
    %c1_75 = arith.constant 1 : index
    %c128_76 = arith.constant 128 : index
    %156 = vector.load %arg4[%c1_75, %c128_76] : memref<4x1024xf32, #tpu.memory_space<vmem>>, vector<1x32xf32>
    %cst_77 = arith.constant dense<0.000000e+00> : vector<16xf32>
    %157 = vector.multi_reduction <add>, %154, %cst_77 [1] : vector<16x32xf32> to vector<16xf32>
    %158 = vector.shape_cast %157 : vector<16xf32> to vector<16x1xf32>
    %cst_78 = arith.constant 3.200000e+01 : f32
    %159 = vector.broadcast %cst_78 : f32 to vector<16x1xf32>
    %160 = arith.divf %158, %159 : vector<16x1xf32>
    %161 = vector.broadcast %160 : vector<16x1xf32> to vector<16x32xf32>
    %162 = arith.subf %154, %161 : vector<16x32xf32>
    %163 = arith.mulf %162, %162 : vector<16x32xf32>
    %cst_79 = arith.constant dense<0.000000e+00> : vector<16xf32>
    %164 = vector.multi_reduction <add>, %163, %cst_79 [1] : vector<16x32xf32> to vector<16xf32>
    %165 = vector.shape_cast %164 : vector<16xf32> to vector<16x1xf32>
    %cst_80 = arith.constant 3.200000e+01 : f32
    %166 = vector.broadcast %cst_80 : f32 to vector<16x1xf32>
    %167 = arith.divf %165, %166 : vector<16x1xf32>
    %168 = vector.broadcast %160 : vector<16x1xf32> to vector<16x32xf32>
    %169 = arith.subf %154, %168 : vector<16x32xf32>
    %cst_81 = arith.constant 9.99999974E-6 : f32
    %170 = vector.broadcast %cst_81 : f32 to vector<16x1xf32>
    %171 = arith.addf %167, %170 : vector<16x1xf32>
    %172 = math.rsqrt %171 : vector<16x1xf32>
    %173 = vector.broadcast %172 : vector<16x1xf32> to vector<16x32xf32>
    %174 = arith.mulf %169, %173 : vector<16x32xf32>
    %175 = vector.broadcast %155 : vector<1x32xf32> to vector<16x32xf32>
    %176 = arith.mulf %174, %175 : vector<16x32xf32>
    %177 = vector.broadcast %156 : vector<1x32xf32> to vector<16x32xf32>
    %178 = arith.addf %176, %177 : vector<16x32xf32>
    %179 = arith.truncf %178 : vector<16x32xf32> to vector<16x32xbf16>
    %c240 = arith.constant 240 : index
    %c0_82 = arith.constant 0 : index
    %180 = vector.load %arg3[%c240, %c0_82] : memref<336x384xbf16, #tpu.memory_space<vmem>>, vector<32x96xbf16>
    %cst_83 = arith.constant dense<0.000000e+00> : vector<16x96xf32>
    %181 = tpu.matmul %179, %180, %cst_83 {dimension_numbers = #tpu.dot_dimension_numbers<[1], [0], [0], [1], [0, 0, 1, 1], [], []>} : vector<16x32xbf16>, vector<32x96xbf16>, vector<16x96xf32> -> vector<16x96xf32>
    %c1_84 = arith.constant 1 : index
    %c768_85 = arith.constant 768 : index
    %182 = vector.load %arg4[%c1_84, %c768_85] : memref<4x1024xf32, #tpu.memory_space<vmem>>, vector<1x96xf32>
    %183 = vector.broadcast %182 : vector<1x96xf32> to vector<16x96xf32>
    %184 = arith.addf %181, %183 : vector<16x96xf32>
    %c0_86 = arith.constant 0 : index
    %c0_87 = arith.constant 0 : index
    %185 = vector.load %arg6[%c0_86, %c0_87] : memref<16x96xf32, #tpu.memory_space<vmem>>, vector<16x96xf32>
    tpu.vector_store %arg6[%c0_86, %c0_87], %184 {strides = array<i32>} : memref<16x96xf32, #tpu.memory_space<vmem>>, vector<16x96xf32>,
    %cst_88 = arith.constant 0.000000e+00 : f32
    %186 = vector.broadcast %cst_88 : f32 to vector<16x32xf32>
    %c0_89 = arith.constant 0 : index
    %c0_90 = arith.constant 0 : index
    %187 = vector.load %arg6[%c0_89, %c0_90] : memref<16x96xf32, #tpu.memory_space<vmem>>, vector<16x16xf32>
    %c0_91 = arith.constant 0 : index
    %c32_92 = arith.constant 32 : index
    %188 = vector.load %arg6[%c0_91, %c32_92] : memref<16x96xf32, #tpu.memory_space<vmem>>, vector<16x16xf32>
    %c0_93 = arith.constant 0 : index
    %c64_94 = arith.constant 64 : index
    %189 = vector.load %arg6[%c0_93, %c64_94] : memref<16x96xf32, #tpu.memory_space<vmem>>, vector<16x16xf32>
    %cst_95 = arith.constant dense<0.000000e+00> : vector<16x16xf32>
    %190 = tpu.matmul %187, %188, %cst_95 {dimension_numbers = #tpu.dot_dimension_numbers<[1], [1], [0], [0], [0, 0, 1, 0], [], []>} : vector<16x16xf32>, vector<16x16xf32>, vector<16x16xf32> -> vector<16x16xf32>
    %cst_96 = arith.constant 2.500000e-01 : f32
    %191 = vector.broadcast %cst_96 : f32 to vector<16x16xf32>
    %192 = arith.mulf %190, %191 : vector<16x16xf32>
    %193 = arith.addf %192, %23 : vector<16x16xf32>
    %cst_97 = arith.constant dense<0xFF800000> : vector<16xf32>
    %194 = vector.multi_reduction <maximumf>, %193, %cst_97 [1] : vector<16x16xf32> to vector<16xf32>
    %195 = vector.shape_cast %194 : vector<16xf32> to vector<16x1xf32>
    %196 = vector.broadcast %195 : vector<16x1xf32> to vector<16x16xf32>
    %197 = arith.subf %193, %196 : vector<16x16xf32>
    %198 = math.exp %197 : vector<16x16xf32>
    %cst_98 = arith.constant dense<0.000000e+00> : vector<16xf32>
    %199 = vector.multi_reduction <add>, %198, %cst_98 [1] : vector<16x16xf32> to vector<16xf32>
    %200 = vector.shape_cast %199 : vector<16xf32> to vector<16x1xf32>
    %201 = tpu.reciprocal %200 {approx = true} : vector<16x1xf32> -> vector<16x1xf32>
    %202 = vector.broadcast %201 : vector<16x1xf32> to vector<16x16xf32>
    %203 = arith.mulf %198, %202 : vector<16x16xf32>
    %cst_99 = arith.constant dense<0.000000e+00> : vector<16x16xf32>
    %204 = tpu.matmul %203, %189, %cst_99 {dimension_numbers = #tpu.dot_dimension_numbers<[1], [0], [0], [1], [0, 0, 1, 1], [], []>} : vector<16x16xf32>, vector<16x16xf32>, vector<16x16xf32> -> vector<16x16xf32>
    %c240_100 = arith.constant 240 : index
    %c96_101 = arith.constant 96 : index
    %205 = vector.load %arg3[%c240_100, %c96_101] : memref<336x384xbf16, #tpu.memory_space<vmem>>, vector<16x32xbf16>
    %206 = arith.truncf %204 : vector<16x16xf32> to vector<16x16xbf16>
    %cst_102 = arith.constant dense<0.000000e+00> : vector<16x32xf32>
    %207 = tpu.matmul %206, %205, %cst_102 {dimension_numbers = #tpu.dot_dimension_numbers<[1], [0], [0], [1], [0, 0, 1, 1], [], []>} : vector<16x16xbf16>, vector<16x32xbf16>, vector<16x32xf32> -> vector<16x32xf32>
    %208 = arith.addf %186, %207 : vector<16x32xf32>
    %c0_103 = arith.constant 0 : index
    %c16_104 = arith.constant 16 : index
    %209 = vector.load %arg6[%c0_103, %c16_104] : memref<16x96xf32, #tpu.memory_space<vmem>>, vector<16x16xf32>
    %c0_105 = arith.constant 0 : index
    %c48_106 = arith.constant 48 : index
    %210 = vector.load %arg6[%c0_105, %c48_106] : memref<16x96xf32, #tpu.memory_space<vmem>>, vector<16x16xf32>
    %c0_107 = arith.constant 0 : index
    %c80_108 = arith.constant 80 : index
    %211 = vector.load %arg6[%c0_107, %c80_108] : memref<16x96xf32, #tpu.memory_space<vmem>>, vector<16x16xf32>
    %cst_109 = arith.constant dense<0.000000e+00> : vector<16x16xf32>
    %212 = tpu.matmul %209, %210, %cst_109 {dimension_numbers = #tpu.dot_dimension_numbers<[1], [1], [0], [0], [0, 0, 1, 0], [], []>} : vector<16x16xf32>, vector<16x16xf32>, vector<16x16xf32> -> vector<16x16xf32>
    %cst_110 = arith.constant 2.500000e-01 : f32
    %213 = vector.broadcast %cst_110 : f32 to vector<16x16xf32>
    %214 = arith.mulf %212, %213 : vector<16x16xf32>
    %215 = arith.addf %214, %23 : vector<16x16xf32>
    %cst_111 = arith.constant dense<0xFF800000> : vector<16xf32>
    %216 = vector.multi_reduction <maximumf>, %215, %cst_111 [1] : vector<16x16xf32> to vector<16xf32>
    %217 = vector.shape_cast %216 : vector<16xf32> to vector<16x1xf32>
    %218 = vector.broadcast %217 : vector<16x1xf32> to vector<16x16xf32>
    %219 = arith.subf %215, %218 : vector<16x16xf32>
    %220 = math.exp %219 : vector<16x16xf32>
    %cst_112 = arith.constant dense<0.000000e+00> : vector<16xf32>
    %221 = vector.multi_reduction <add>, %220, %cst_112 [1] : vector<16x16xf32> to vector<16xf32>
    %222 = vector.shape_cast %221 : vector<16xf32> to vector<16x1xf32>
    %223 = tpu.reciprocal %222 {approx = true} : vector<16x1xf32> -> vector<16x1xf32>
    %224 = vector.broadcast %223 : vector<16x1xf32> to vector<16x16xf32>
    %225 = arith.mulf %220, %224 : vector<16x16xf32>
    %cst_113 = arith.constant dense<0.000000e+00> : vector<16x16xf32>
    %226 = tpu.matmul %225, %211, %cst_113 {dimension_numbers = #tpu.dot_dimension_numbers<[1], [0], [0], [1], [0, 0, 1, 1], [], []>} : vector<16x16xf32>, vector<16x16xf32>, vector<16x16xf32> -> vector<16x16xf32>
    %c256_114 = arith.constant 256 : index
    %c96_115 = arith.constant 96 : index
    %227 = vector.load %arg3[%c256_114, %c96_115] : memref<336x384xbf16, #tpu.memory_space<vmem>>, vector<16x32xbf16>
    %228 = arith.truncf %226 : vector<16x16xf32> to vector<16x16xbf16>
    %cst_116 = arith.constant dense<0.000000e+00> : vector<16x32xf32>
    %229 = tpu.matmul %228, %227, %cst_116 {dimension_numbers = #tpu.dot_dimension_numbers<[1], [0], [0], [1], [0, 0, 1, 1], [], []>} : vector<16x16xbf16>, vector<16x32xbf16>, vector<16x32xf32> -> vector<16x32xf32>
    %230 = arith.addf %208, %229 : vector<16x32xf32>
    %231 = arith.addf %154, %230 : vector<16x32xf32>
    %c1_117 = arith.constant 1 : index
    %c512_118 = arith.constant 512 : index
    %232 = vector.load %arg4[%c1_117, %c512_118] : memref<4x1024xf32, #tpu.memory_space<vmem>>, vector<1x32xf32>
    %233 = vector.broadcast %232 : vector<1x32xf32> to vector<16x32xf32>
    %234 = arith.addf %231, %233 : vector<16x32xf32>
    %c1_119 = arith.constant 1 : index
    %c256_120 = arith.constant 256 : index
    %235 = vector.load %arg4[%c1_119, %c256_120] : memref<4x1024xf32, #tpu.memory_space<vmem>>, vector<1x32xf32>
    %c1_121 = arith.constant 1 : index
    %c384_122 = arith.constant 384 : index
    %236 = vector.load %arg4[%c1_121, %c384_122] : memref<4x1024xf32, #tpu.memory_space<vmem>>, vector<1x32xf32>
    %cst_123 = arith.constant dense<0.000000e+00> : vector<16xf32>
    %237 = vector.multi_reduction <add>, %234, %cst_123 [1] : vector<16x32xf32> to vector<16xf32>
    %238 = vector.shape_cast %237 : vector<16xf32> to vector<16x1xf32>
    %cst_124 = arith.constant 3.200000e+01 : f32
    %239 = vector.broadcast %cst_124 : f32 to vector<16x1xf32>
    %240 = arith.divf %238, %239 : vector<16x1xf32>
    %241 = vector.broadcast %240 : vector<16x1xf32> to vector<16x32xf32>
    %242 = arith.subf %234, %241 : vector<16x32xf32>
    %243 = arith.mulf %242, %242 : vector<16x32xf32>
    %cst_125 = arith.constant dense<0.000000e+00> : vector<16xf32>
    %244 = vector.multi_reduction <add>, %243, %cst_125 [1] : vector<16x32xf32> to vector<16xf32>
    %245 = vector.shape_cast %244 : vector<16xf32> to vector<16x1xf32>
    %cst_126 = arith.constant 3.200000e+01 : f32
    %246 = vector.broadcast %cst_126 : f32 to vector<16x1xf32>
    %247 = arith.divf %245, %246 : vector<16x1xf32>
    %248 = vector.broadcast %240 : vector<16x1xf32> to vector<16x32xf32>
    %249 = arith.subf %234, %248 : vector<16x32xf32>
    %cst_127 = arith.constant 9.99999974E-6 : f32
    %250 = vector.broadcast %cst_127 : f32 to vector<16x1xf32>
    %251 = arith.addf %247, %250 : vector<16x1xf32>
    %252 = math.rsqrt %251 : vector<16x1xf32>
    %253 = vector.broadcast %252 : vector<16x1xf32> to vector<16x32xf32>
    %254 = arith.mulf %249, %253 : vector<16x32xf32>
    %255 = vector.broadcast %235 : vector<1x32xf32> to vector<16x32xf32>
    %256 = arith.mulf %254, %255 : vector<16x32xf32>
    %257 = vector.broadcast %236 : vector<1x32xf32> to vector<16x32xf32>
    %258 = arith.addf %256, %257 : vector<16x32xf32>
    %259 = arith.truncf %258 : vector<16x32xf32> to vector<16x32xbf16>
    %c240_128 = arith.constant 240 : index
    %c128_129 = arith.constant 128 : index
    %260 = vector.load %arg3[%c240_128, %c128_129] : memref<336x384xbf16, #tpu.memory_space<vmem>>, vector<32x128xbf16>
    %cst_130 = arith.constant dense<0.000000e+00> : vector<16x128xf32>
    %261 = tpu.matmul %259, %260, %cst_130 {dimension_numbers = #tpu.dot_dimension_numbers<[1], [0], [0], [1], [0, 0, 1, 1], [], []>} : vector<16x32xbf16>, vector<32x128xbf16>, vector<16x128xf32> -> vector<16x128xf32>
    %c1_131 = arith.constant 1 : index
    %c896_132 = arith.constant 896 : index
    %262 = vector.load %arg4[%c1_131, %c896_132] : memref<4x1024xf32, #tpu.memory_space<vmem>>, vector<1x128xf32>
    %263 = vector.broadcast %262 : vector<1x128xf32> to vector<16x128xf32>
    %264 = arith.addf %261, %263 : vector<16x128xf32>
    %265 = arith.mulf %264, %264 : vector<16x128xf32>
    %266 = arith.mulf %264, %265 : vector<16x128xf32>
    %cst_133 = arith.constant 4.471500e-02 : f32
    %267 = vector.broadcast %cst_133 : f32 to vector<16x128xf32>
    %268 = arith.mulf %267, %266 : vector<16x128xf32>
    %269 = arith.addf %264, %268 : vector<16x128xf32>
    %cst_134 = arith.constant 0.797884583 : f32
    %270 = vector.broadcast %cst_134 : f32 to vector<16x128xf32>
    %271 = arith.mulf %270, %269 : vector<16x128xf32>
    %272 = math.tanh %271 : vector<16x128xf32>
    %cst_135 = arith.constant 1.000000e+00 : f32
    %273 = vector.broadcast %cst_135 : f32 to vector<16x128xf32>
    %274 = arith.addf %273, %272 : vector<16x128xf32>
    %cst_136 = arith.constant 5.000000e-01 : f32
    %275 = vector.broadcast %cst_136 : f32 to vector<16x128xf32>
    %276 = arith.mulf %275, %274 : vector<16x128xf32>
    %277 = arith.mulf %264, %276 : vector<16x128xf32>
    %278 = arith.truncf %277 : vector<16x128xf32> to vector<16x128xbf16>
    %c240_137 = arith.constant 240 : index
    %c256_138 = arith.constant 256 : index
    %279 = vector.load %arg3[%c240_137, %c256_138] : memref<336x384xbf16, #tpu.memory_space<vmem>>, vector<32x128xbf16>
    %cst_139 = arith.constant dense<0.000000e+00> : vector<16x32xf32>
    %280 = tpu.matmul %278, %279, %cst_139 {dimension_numbers = #tpu.dot_dimension_numbers<[1], [1], [0], [0], [0, 0, 1, 0], [], []>} : vector<16x128xbf16>, vector<32x128xbf16>, vector<16x32xf32> -> vector<16x32xf32>
    %281 = arith.addf %234, %280 : vector<16x32xf32>
    %c1_140 = arith.constant 1 : index
    %c640_141 = arith.constant 640 : index
    %282 = vector.load %arg4[%c1_140, %c640_141] : memref<4x1024xf32, #tpu.memory_space<vmem>>, vector<1x32xf32>
    %283 = vector.broadcast %282 : vector<1x32xf32> to vector<16x32xf32>
    %284 = arith.addf %281, %283 : vector<16x32xf32>
    %c3 = arith.constant 3 : index
    %c0_142 = arith.constant 0 : index
    %285 = vector.load %arg4[%c3, %c0_142] : memref<4x1024xf32, #tpu.memory_space<vmem>>, vector<1x32xf32>
    %c3_143 = arith.constant 3 : index
    %c128_144 = arith.constant 128 : index
    %286 = vector.load %arg4[%c3_143, %c128_144] : memref<4x1024xf32, #tpu.memory_space<vmem>>, vector<1x32xf32>
    %cst_145 = arith.constant dense<0.000000e+00> : vector<16xf32>
    %287 = vector.multi_reduction <add>, %284, %cst_145 [1] : vector<16x32xf32> to vector<16xf32>
    %288 = vector.shape_cast %287 : vector<16xf32> to vector<16x1xf32>
    %cst_146 = arith.constant 3.200000e+01 : f32
    %289 = vector.broadcast %cst_146 : f32 to vector<16x1xf32>
    %290 = arith.divf %288, %289 : vector<16x1xf32>
    %291 = vector.broadcast %290 : vector<16x1xf32> to vector<16x32xf32>
    %292 = arith.subf %284, %291 : vector<16x32xf32>
    %293 = arith.mulf %292, %292 : vector<16x32xf32>
    %cst_147 = arith.constant dense<0.000000e+00> : vector<16xf32>
    %294 = vector.multi_reduction <add>, %293, %cst_147 [1] : vector<16x32xf32> to vector<16xf32>
    %295 = vector.shape_cast %294 : vector<16xf32> to vector<16x1xf32>
    %cst_148 = arith.constant 3.200000e+01 : f32
    %296 = vector.broadcast %cst_148 : f32 to vector<16x1xf32>
    %297 = arith.divf %295, %296 : vector<16x1xf32>
    %298 = vector.broadcast %290 : vector<16x1xf32> to vector<16x32xf32>
    %299 = arith.subf %284, %298 : vector<16x32xf32>
    %cst_149 = arith.constant 9.99999974E-6 : f32
    %300 = vector.broadcast %cst_149 : f32 to vector<16x1xf32>
    %301 = arith.addf %297, %300 : vector<16x1xf32>
    %302 = math.rsqrt %301 : vector<16x1xf32>
    %303 = vector.broadcast %302 : vector<16x1xf32> to vector<16x32xf32>
    %304 = arith.mulf %299, %303 : vector<16x32xf32>
    %305 = vector.broadcast %285 : vector<1x32xf32> to vector<16x32xf32>
    %306 = arith.mulf %304, %305 : vector<16x32xf32>
    %307 = vector.broadcast %286 : vector<1x32xf32> to vector<16x32xf32>
    %308 = arith.addf %306, %307 : vector<16x32xf32>
    %309 = arith.truncf %308 : vector<16x32xf32> to vector<16x32xbf16>
    %c272 = arith.constant 272 : index
    %c0_150 = arith.constant 0 : index
    %310 = vector.load %arg3[%c272, %c0_150] : memref<336x384xbf16, #tpu.memory_space<vmem>>, vector<32x128xbf16>
    %cst_151 = arith.constant dense<0.000000e+00> : vector<16x128xf32>
    %311 = tpu.matmul %309, %310, %cst_151 {dimension_numbers = #tpu.dot_dimension_numbers<[1], [0], [0], [1], [0, 0, 1, 1], [], []>} : vector<16x32xbf16>, vector<32x128xbf16>, vector<16x128xf32> -> vector<16x128xf32>
    %c3_152 = arith.constant 3 : index
    %c256_153 = arith.constant 256 : index
    %312 = vector.load %arg4[%c3_152, %c256_153] : memref<4x1024xf32, #tpu.memory_space<vmem>>, vector<1x128xf32>
    %313 = vector.broadcast %312 : vector<1x128xf32> to vector<16x128xf32>
    %314 = arith.addf %311, %313 : vector<16x128xf32>
    %315 = arith.truncf %22 : vector<2x32xf32> to vector<2x32xbf16>
    %c304 = arith.constant 304 : index
    %c0_154 = arith.constant 0 : index
    %316 = vector.load %arg3[%c304, %c0_154] : memref<336x384xbf16, #tpu.memory_space<vmem>>, vector<32x128xbf16>
    %cst_155 = arith.constant dense<0.000000e+00> : vector<2x128xf32>
    %317 = tpu.matmul %315, %316, %cst_155 {dimension_numbers = #tpu.dot_dimension_numbers<[1], [0], [0], [1], [0, 0, 1, 1], [], []>} : vector<2x32xbf16>, vector<32x128xbf16>, vector<2x128xf32> -> vector<2x128xf32>
    %318 = vector.shape_cast %314 : vector<16x128xf32> to vector<2x8x128xf32>
    %319 = vector.shape_cast %317 : vector<2x128xf32> to vector<2x1x128xf32>
    %320 = vector.broadcast %319 : vector<2x1x128xf32> to vector<2x8x128xf32>
    %321 = arith.addf %318, %320 : vector<2x8x128xf32>
    %322 = vector.shape_cast %321 : vector<2x8x128xf32> to vector<16x128xf32>
    %c0_156 = arith.constant 0 : index
    %c0_157 = arith.constant 0 : index
    %323 = vector.load %arg5[%c0_156, %c0_157] : memref<16x128xf32, #tpu.memory_space<vmem>>, vector<16x128xf32>
    tpu.vector_store %arg5[%c0_156, %c0_157], %322 {strides = array<i32>} : memref<16x128xf32, #tpu.memory_space<vmem>>, vector<16x128xf32>,
    return
  }
}

</mosaic_0001>

<llo_original>
// kernel: tpu_custom_call.1
$region0: #{tpu_custom_call.1}
  #allocation0 [shape = 'u32[]', space=smem, size = 0x4, offset = 0x4, fixed_abs, tag = 'smem constant byte address 0x4 - core index']
  #allocation1 [shape = 'u32[144,128]{1,0:T(1,128)}', space=vmem, size = 0x12000, scoped, tag = 'internal scratch']
  #allocation2 [shape = 'f32[16,96]{1,0:T(8,128)}', space=vmem, size = 0x2000, scoped, tag = 'scratch operand']
  %s0 = inlined_call_operand.hbm [shape: f32[16,32], index: 0, kind: input, shape index: {}]
  %s1 = inlined_call_operand.hbm [shape: f32[16,16], index: 1, kind: input, shape index: {}]
  %s2 = inlined_call_operand.vmem [shape: f32[2,16], index: 2, kind: input, shape index: {}]
  %s3 = inlined_call_operand.hbm [shape: bf16[336,384], index: 3, kind: input, shape index: {}]
  %s4 = inlined_call_operand.hbm [shape: f32[4,1024], index: 4, kind: input, shape index: {}]
  %s5 = inlined_call_operand.hbm [shape: f32[16,128], index: 5, kind: output, shape index: {}]
  %s6 = sld [smem:[#allocation0]]
  $region46: #{tpu_custom_call.1} parent=0
    _
  %s8 = ssub.s32 1, %s6
  %s9 = scalar_select 0, %s8, %s6
  $region1: #{tpu_custom_call.1} parent=0
    #allocation3 [shape = 'u8[8192]{0}', space=vmem, size = 0x2000, scoped, tag = 'input window, operand 0, single buffered']
    #allocation4 [shape = 's32[1]{0}', space=sflag, size = 0x4, scoped, tag = 'scoped memory for tpu_custom_call.1']
    #allocation5 [shape = 's32[1]{0}', space=sflag, size = 0x4, scoped, tag = 'scoped memory for tpu_custom_call.1']
    #allocation6 [shape = 'u8[8192]{0}', space=vmem, size = 0x2000, scoped, tag = 'input window, operand 1, single buffered']
    #allocation7 [shape = 's32[1]{0}', space=sflag, size = 0x4, scoped, tag = 'scoped memory for tpu_custom_call.1']
    #allocation8 [shape = 'u8[258048]{0}', space=vmem, size = 0x3f000, scoped, tag = 'input window, operand 3, single buffered']
    #allocation9 [shape = 'u8[16384]{0}', space=vmem, size = 0x4000, scoped, tag = 'input window, operand 4, single buffered']
    #allocation10 [shape = 's32[1]{0}', space=sflag, size = 0x4, scoped, tag = 'scoped memory for tpu_custom_call.1']
    #allocation11 [shape = 'u8[8192]{0}', space=vmem, size = 0x2000, scoped, tag = 'output window, operand 0, single buffered']
    %10 = vsyncpa [#allocation4], 0
    %11 = vsyncpa [#allocation7], 0
    %12 = vsyncpa [#allocation10], 0
    %13 = vsyncpa [#allocation5], 0
    // Predicated region
    $region2: #{tpu_custom_call.1} parent=1 // pred_check
      _
    $region3: #{tpu_custom_call.1} parent=1 // pred_check_branch
      %15 = sbr.rel (0) target = $region5
    $region4: #{tpu_custom_call.1} parent=1 // pred_region
      %s17 = ssub.s32 256, 256
      %18 = vsyncadd [#allocation4], %s17
      %s19 = sshll.u32 [#allocation3], 4
      %s20 = int_to_ptr.vmem [resolvable:$true] %s19
      %25 = dma.hbm_to_vmem [thread:$0]  %s0, 256, %s20, [#allocation4], 128, 128, 8
    $region5: #{tpu_custom_call.1} parent=1 // pred_fallthru
      _
    // Predicated region
    $region6: #{tpu_custom_call.1} parent=1 // pred_check
      _
    $region7: #{tpu_custom_call.1} parent=1 // pred_check_branch
      %27 = sbr.rel (0) target = $region9
    $region8: #{tpu_custom_call.1} parent=1 // pred_region
      %s29 = ssub.s32 256, 256
      %30 = vsyncadd [#allocation7], %s29
      %s31 = sshll.u32 [#allocation6], 4
      %s32 = int_to_ptr.vmem [resolvable:$true] %s31
      %37 = dma.hbm_to_vmem [thread:$0]  %s1, 256, %s32, [#allocation7], 128, 128, 8
    $region9: #{tpu_custom_call.1} parent=1 // pred_fallthru
      _
    // Predicated region
    $region10: #{tpu_custom_call.1} parent=1 // pred_check
      _
    $region11: #{tpu_custom_call.1} parent=1 // pred_check_branch
      %39 = sbr.rel (0) target = $region13
    $region12: #{tpu_custom_call.1} parent=1 // pred_region
      _
    $region13: #{tpu_custom_call.1} parent=1 // pred_fallthru
      _
    // Predicated region
    $region14: #{tpu_custom_call.1} parent=1 // pred_check
      _
    $region15: #{tpu_custom_call.1} parent=1 // pred_check_branch
      %41 = sbr.rel (0) target = $region17
    $region16: #{tpu_custom_call.1} parent=1 // pred_region
      %s43 = ssub.s32 8064, 8064
      %44 = vsyncadd [#allocation7], %s43
      %s45 = sshll.u32 [#allocation8], 4
      %s46 = int_to_ptr.vmem [resolvable:$true] %s45
      %51 = dma.hbm_to_vmem [thread:$0]  %s3, 8064, %s46, [#allocation7], 192, 192, 12
    $region17: #{tpu_custom_call.1} parent=1 // pred_fallthru
      _
    // Predicated region
    $region18: #{tpu_custom_call.1} parent=1 // pred_check
      _
    $region19: #{tpu_custom_call.1} parent=1 // pred_check_branch
      %53 = sbr.rel (0) target = $region21
    $region20: #{tpu_custom_call.1} parent=1 // pred_region
      %s55 = ssub.s32 512, 512
      %56 = vsyncadd [#allocation10], %s55
      %s58 = sshll.u32 [#allocation9], 4
      %s59 = int_to_ptr.vmem [resolvable:$true] %s58
      %61 = dma.hbm_to_vmem [thread:$0]  %s4, 512, %s59, [#allocation10]
    $region21: #{tpu_custom_call.1} parent=1 // pred_fallthru
      _
    // Predicated region
    $region22: #{tpu_custom_call.1} parent=1 // pred_check
      _
    $region23: #{tpu_custom_call.1} parent=1 // pred_check_branch
      %63 = sbr.rel (0) target = $region25
    $region24: #{tpu_custom_call.1} parent=1 // pred_region
      %64 = dma.done [#allocation4], 256
    $region25: #{tpu_custom_call.1} parent=1 // pred_fallthru
      _
    // Predicated region
    $region26: #{tpu_custom_call.1} parent=1 // pred_check
      _
    $region27: #{tpu_custom_call.1} parent=1 // pred_check_branch
      %66 = sbr.rel (0) target = $region29
    $region28: #{tpu_custom_call.1} parent=1 // pred_region
      %67 = dma.done [#allocation7], 256
    $region29: #{tpu_custom_call.1} parent=1 // pred_fallthru
      _
    // Predicated region
    $region30: #{tpu_custom_call.1} parent=1 // pred_check
      _
    $region31: #{tpu_custom_call.1} parent=1 // pred_check_branch
      %69 = sbr.rel (0) target = $region33
    $region32: #{tpu_custom_call.1} parent=1 // pred_region
      %70 = dma.done [#allocation7], 8064
    $region33: #{tpu_custom_call.1} parent=1 // pred_fallthru
      _
    // Predicated region
    $region34: #{tpu_custom_call.1} parent=1 // pred_check
      _
    $region35: #{tpu_custom_call.1} parent=1 // pred_check_branch
      %72 = sbr.rel (0) target = $region37
    $region36: #{tpu_custom_call.1} parent=1 // pred_region
      %73 = dma.done [#allocation10], 512
    $region37: #{tpu_custom_call.1} parent=1 // pred_fallthru
      _
    %v75 = vld [vmem:[%s2] sm:$0x3]
    %v76 = vld [vmem:[#allocation8] sm:$0xf]
    %v77 = vld [vmem:[#allocation8 + $0xc] sm:$0xf]
    %v78 = vld [vmem:[#allocation9 + $0x2] sm:$0x1]
    %v79 = vpack.c.bf16 %v75, %v75
    %v80 = vlaneseq
    %v81 = vshrl.u32 %v80, 7
    %v82 = vsub.s32 0, %v81
    %v83 = vrot.slane %v78, %v82
    %v86 = vunpack.c.l.b16 %v76
    %v87 = vunpack.c.l.b16 %v77
    %v88 = vpack.c.b16 %v87, %v86
    %vm90 = vcmask 130048
    %v92 = vsel %vm90, %v79, 0
    %94 = vmatprep.subr.bf16.mxu0 0
    %95 = vmatpush1.bf16.msra.mxu0 0
    %96 = vmatprep.subr.bf16.mxu0 0
    %97 = vmatpush1.bf16.msra.mxu0 0
    %98 = vmatprep.subr.bf16.mxu0 0
    %99 = vmatpush1.bf16.msra.mxu0 0
    %100 = vmatprep.subr.bf16.mxu0 0
    %101 = vmatpush1.bf16.msra.mxu0 0
    %102 = vmatprep.subr.bf16.mxu0 0
    %103 = vmatpush1.bf16.msra.mxu0 0
    %104 = vmatprep.subr.bf16.mxu0 0
    %105 = vmatpush1.bf16.msra.mxu0 0
    %106 = vmatprep.subr.bf16.mxu0 0
    %107 = vmatpush1.bf16.msra.mxu0 0
    %108 = vmatprep.subr.bf16.mxu0 0
    %109 = vmatpush1.bf16.msra.mxu0 %v88
    %110 = vmatprep.subr.bf16.mxu0 0
    %111 = vmatpush2.bf16.msra.mxu0 0
    %112 = vmatprep.subr.bf16.mxu0 0
    %113 = vmatpush2.bf16.msra.mxu0 0
    %114 = vmatprep.subr.bf16.mxu0 0
    %115 = vmatpush2.bf16.msra.mxu0 0
    %116 = vmatprep.subr.bf16.mxu0 0
    %117 = vmatpush2.bf16.msra.mxu0 0
    %118 = vmatprep.subr.bf16.mxu0 0
    %119 = vmatpush2.bf16.msra.mxu0 0
    %120 = vmatprep.subr.bf16.mxu0 0
    %121 = vmatpush2.bf16.msra.mxu0 0
    %122 = vmatprep.subr.bf16.mxu0 0
    %123 = vmatpush2.bf16.msra.mxu0 0
    %124 = vmatprep.subr.bf16.mxu0 0
    %125 = vmatpush2.bf16.msra.mxu0 0
    %126 = vmatprep.mubr.bf16.mxu0 0
    %127 = vmatmul.mubr.bf16.gmra.mxu0 %v92
    %v128 = vpop.f32.mrf.mxu0
    %v129 = vadd.f32 %v83, %v128
    %v130 = vpop.f32.mrf.mxu0
    %v131 = vpop.f32.mrf.mxu0
    %v132 = vpop.f32.mrf.mxu0
    %133 = vdwg.mxu0
    %v134 = vmax.f32 %v129, 0.0
    %v135 = vld [vmem:[#allocation8 + $0x18] sm:$0xf]
    %v136 = vld [vmem:[#allocation8 + $0x24] sm:$0xf]
    %v137 = vld [vmem:[#allocation8 + $0x30] sm:$0xf]
    %v138 = vld [vmem:[#allocation8 + $0x3c] sm:$0xf]
    %v139 = vld [vmem:[#allocation8 + $0x48] sm:$0xf]
    %v140 = vld [vmem:[#allocation8 + $0x54] sm:$0xf]
    %v141 = vld [vmem:[#allocation8 + $0x60] sm:$0xf]
    %v142 = vld [vmem:[#allocation8 + $0x6c] sm:$0xf]
    %v143 = vld [vmem:[#allocation8 + $0x78] sm:$0xf]
    %v144 = vld [vmem:[#allocation8 + $0x84] sm:$0xf]
    %v145 = vld [vmem:[#allocation8 + $0x90] sm:$0xf]
    %v146 = vld [vmem:[#allocation8 + $0x9c] sm:$0xf]
    %v147 = vld [vmem:[#allocation8 + $0xa8] sm:$0xf]
    %v148 = vld [vmem:[#allocation8 + $0xb4] sm:$0xf]
    %v149 = vld [vmem:[#allocation8 + $0xc0] sm:$0xf]
    %v150 = vld [vmem:[#allocation8 + $0xcc] sm:$0xf]
    %v151 = vld [vmem:[#allocation9 + $0x6] sm:$0x1]
    %v152 = vpack.c.bf16 %v134, %v134
    %v153 = vlaneseq
    %v154 = vshrl.u32 %v153, 7
    %v155 = vsub.s32 0, %v154
    %v156 = vrot.slane %v151, %v155
    %v173 = vunpack.c.l.b16 %v135
    %v174 = vunpack.c.l.b16 %v136
    %v175 = vunpack.c.l.b16 %v137
    %v176 = vunpack.c.l.b16 %v138
    %v177 = vunpack.c.l.b16 %v139
    %v178 = vunpack.c.l.b16 %v140
    %v179 = vunpack.c.l.b16 %v141
    %v180 = vunpack.c.l.b16 %v142
    %v181 = vunpack.c.l.b16 %v143
    %v182 = vunpack.c.l.b16 %v144
    %v183 = vunpack.c.l.b16 %v145
    %v184 = vunpack.c.l.b16 %v146
    %v185 = vunpack.c.l.b16 %v147
    %v186 = vunpack.c.l.b16 %v148
    %v187 = vunpack.c.l.b16 %v149
    %v188 = vunpack.c.l.b16 %v150
    %v189 = vpack.c.b16 %v174, %v173
    %v190 = vpack.c.b16 %v176, %v175
    %v191 = vpack.c.b16 %v178, %v177
    %v192 = vpack.c.b16 %v180, %v179
    %v193 = vpack.c.b16 %v182, %v181
    %v194 = vpack.c.b16 %v184, %v183
    %v195 = vpack.c.b16 %v186, %v185
    %v196 = vpack.c.b16 %v188, %v187
    %205 = vmatprep.subr.bf16.mxu0 0
    %206 = vmatpush1.bf16.msra.mxu0 %v196
    %207 = vmatprep.subr.bf16.mxu0 0
    %208 = vmatpush1.bf16.msra.mxu0 %v195
    %209 = vmatprep.subr.bf16.mxu0 0
    %210 = vmatpush1.bf16.msra.mxu0 %v194
    %211 = vmatprep.subr.bf16.mxu0 0
    %212 = vmatpush1.bf16.msra.mxu0 %v193
    %213 = vmatprep.subr.bf16.mxu0 0
    %214 = vmatpush1.bf16.msra.mxu0 %v192
    %215 = vmatprep.subr.bf16.mxu0 0
    %216 = vmatpush1.bf16.msra.mxu0 %v191
    %217 = vmatprep.subr.bf16.mxu0 0
    %218 = vmatpush1.bf16.msra.mxu0 %v190
    %219 = vmatprep.subr.bf16.mxu0 0
    %220 = vmatpush1.bf16.msra.mxu0 %v189
    %221 = vmatprep.subr.bf16.mxu0 0
    %222 = vmatpush2.bf16.msra.mxu0 0
    %223 = vmatprep.subr.bf16.mxu0 0
    %224 = vmatpush2.bf16.msra.mxu0 0
    %225 = vmatprep.subr.bf16.mxu0 0
    %226 = vmatpush2.bf16.msra.mxu0 0
    %227 = vmatprep.subr.bf16.mxu0 0
    %228 = vmatpush2.bf16.msra.mxu0 0
    %229 = vmatprep.subr.bf16.mxu0 0
    %230 = vmatpush2.bf16.msra.mxu0 0
    %231 = vmatprep.subr.bf16.mxu0 0
    %232 = vmatpush2.bf16.msra.mxu0 0
    %233 = vmatprep.subr.bf16.mxu0 0
    %234 = vmatpush2.bf16.msra.mxu0 0
    %235 = vmatprep.subr.bf16.mxu0 0
    %236 = vmatpush2.bf16.msra.mxu0 0
    %237 = vmatprep.mubr.bf16.mxu0 0
    %238 = vmatmul.mubr.bf16.gmra.mxu0 %v152
    %v239 = vpop.f32.mrf.mxu0
    %v240 = vadd.f32 %v156, %v239
    %v241 = vpop.f32.mrf.mxu0
    %v242 = vpop.f32.mrf.mxu0
    %v243 = vpop.f32.mrf.mxu0
    %244 = vdwg.mxu0
    %v245 = vmax.f32 %v240, 0.0
    %v246 = vld [vmem:[#allocation8 + $0xd8] sm:$0xf]
    %v247 = vld [vmem:[#allocation8 + $0xe4] sm:$0xf]
    %v248 = vld [vmem:[#allocation8 + $0xf0] sm:$0xf]
    %v249 = vld [vmem:[#allocation8 + $0xfc] sm:$0xf]
    %v250 = vld [vmem:[#allocation8 + $0x108] sm:$0xf]
    %v251 = vld [vmem:[#allocation8 + $0x114] sm:$0xf]
    %v252 = vld [vmem:[#allocation8 + $0x120] sm:$0xf]
    %v253 = vld [vmem:[#allocation8 + $0x12c] sm:$0xf]
    %v254 = vld [vmem:[#allocation9 + $0xa] sm:$0x1]
    %v255 = vpack.c.bf16 %v245, %v245
    %v256 = vlaneseq
    %v257 = vshrl.u32 %v256, 7
    %v258 = vsub.s32 0, %v257
    %v259 = vrot.slane %v254, %v258
    %v268 = vunpack.c.l.b16 %v246
    %v269 = vunpack.c.l.b16 %v247
    %v270 = vunpack.c.l.b16 %v248
    %v271 = vunpack.c.l.b16 %v249
    %v272 = vunpack.c.l.b16 %v250
    %v273 = vunpack.c.l.b16 %v251
    %v274 = vunpack.c.l.b16 %v252
    %v275 = vunpack.c.l.b16 %v253
    %v276 = vpack.c.b16 %v269, %v268
    %v277 = vpack.c.b16 %v271, %v270
    %v278 = vpack.c.b16 %v273, %v272
    %v279 = vpack.c.b16 %v275, %v274
    %vm284 = vcmask 523264
    %v286 = vsel %vm284, %v255, 0
    %288 = vmatprep.subr.bf16.mxu0 0
    %289 = vmatpush1.bf16.msra.mxu0 0
    %290 = vmatprep.subr.bf16.mxu0 0
    %291 = vmatpush1.bf16.msra.mxu0 0
    %292 = vmatprep.subr.bf16.mxu0 0
    %293 = vmatpush1.bf16.msra.mxu0 0
    %294 = vmatprep.subr.bf16.mxu0 0
    %295 = vmatpush1.bf16.msra.mxu0 0
    %296 = vmatprep.subr.bf16.mxu0 0
    %297 = vmatpush1.bf16.msra.mxu0 %v279
    %298 = vmatprep.subr.bf16.mxu0 0
    %299 = vmatpush1.bf16.msra.mxu0 %v278
    %300 = vmatprep.subr.bf16.mxu0 0
    %301 = vmatpush1.bf16.msra.mxu0 %v277
    %302 = vmatprep.subr.bf16.mxu0 0
    %303 = vmatpush1.bf16.msra.mxu0 %v276
    %304 = vmatprep.subr.bf16.mxu0 0
    %305 = vmatpush2.bf16.msra.mxu0 0
    %306 = vmatprep.subr.bf16.mxu0 0
    %307 = vmatpush2.bf16.msra.mxu0 0
    %308 = vmatprep.subr.bf16.mxu0 0
    %309 = vmatpush2.bf16.msra.mxu0 0
    %310 = vmatprep.subr.bf16.mxu0 0
    %311 = vmatpush2.bf16.msra.mxu0 0
    %312 = vmatprep.subr.bf16.mxu0 0
    %313 = vmatpush2.bf16.msra.mxu0 0
    %314 = vmatprep.subr.bf16.mxu0 0
    %315 = vmatpush2.bf16.msra.mxu0 0
    %316 = vmatprep.subr.bf16.mxu0 0
    %317 = vmatpush2.bf16.msra.mxu0 0
    %318 = vmatprep.subr.bf16.mxu0 0
    %319 = vmatpush2.bf16.msra.mxu0 0
    %320 = vmatprep.mubr.bf16.mxu0 0
    %321 = vmatmul.mubr.bf16.gmra.mxu0 %v286
    %v322 = vpop.f32.mrf.mxu0
    %v323 = vadd.f32 %v259, %v322
    %v324 = vpop.f32.mrf.mxu0
    %v325 = vpop.f32.mrf.mxu0
    %v326 = vpop.f32.mrf.mxu0
    %327 = vdwg.mxu0
    %v328 = vld [vmem:[#allocation6] sm:$0xff]
    %v329 = vld [vmem:[#allocation6 + $0x8] sm:$0xff]
    %v330 = vld [vmem:[#allocation3] sm:$0xff]
    %v331 = vld [vmem:[#allocation3 + $0x8] sm:$0xff]
    %v332 = vld [vmem:[#allocation9] sm:$0x1]
    %v333 = vld [vmem:[#allocation9 + $0x4] sm:$0x1]
    %vm334 = vcmask 261120
    %v335 = vsel %vm334, %v330, 0.0
    %336 = vadd.xlane.f32.xlu0 %v335
    %v337 = vpop.xlane.xlu0 %336
    %v338 = vsel %vm334, %v331, 0.0
    %339 = vadd.xlane.f32.xlu0 %v338
    %v340 = vpop.xlane.xlu0 %339
    %v341 = vrcp.pop 32.0
    %v342 = vmul.f32 %v337, %v341
    %v343 = vmul.f32 %v340, %v341
    %v344 = vsub.f32 %v330, %v342
    %v345 = vsub.f32 %v331, %v343
    %v346 = vmul.f32 %v344, %v344
    %v347 = vmul.f32 %v345, %v345
    %v348 = vsel %vm334, %v346, 0.0
    %349 = vadd.xlane.f32.xlu0 %v348
    %v350 = vpop.xlane.xlu0 %349
    %v351 = vsel %vm334, %v347, 0.0
    %352 = vadd.xlane.f32.xlu0 %v351
    %v353 = vpop.xlane.xlu0 %352
    %v354 = vmul.f32 %v350, %v341
    %v355 = vmul.f32 %v353, %v341
    %v356 = vadd.f32 %v354, 1e-05
    %v357 = vadd.f32 %v355, 1e-05
    %v358 = vrsqrt.pop %v356
    %v359 = vrsqrt.pop %v357
    %v360 = vmul.f32 %v344, %v358
    %v361 = vmul.f32 %v345, %v359
    %v362 = vlaneseq
    %v363 = vshrl.u32 %v362, 7
    %v364 = vsub.s32 0, %v363
    %v365 = vrot.slane %v332, %v364
    %v366 = vmul.f32 %v360, %v365
    %v367 = vmul.f32 %v361, %v365
    %v368 = vlaneseq
    %v369 = vshrl.u32 %v368, 7
    %v370 = vsub.s32 0, %v369
    %v371 = vrot.slane %v333, %v370
    %v372 = vadd.f32 %v366, %v371
    %v373 = vadd.f32 %v367, %v371
    %v374 = vpack.c.bf16 %v373, %v372
    %v375 = vld [vmem:[#allocation8 + $0x138] sm:$0xf]
    %v376 = vld [vmem:[#allocation8 + $0x144] sm:$0xf]
    %v377 = vld [vmem:[#allocation8 + $0x150] sm:$0xf]
    %v378 = vld [vmem:[#allocation8 + $0x15c] sm:$0xf]
    %v379 = vld [vmem:[#allocation9 + $0x18] sm:$0x1]
    %v380 = vlaneseq
    %v381 = vshrl.u32 %v380, 7
    %v382 = vsub.s32 0, %v381
    %v383 = vrot.slane %v379, %v382
    %v388 = vunpack.c.l.b16 %v375
    %v389 = vunpack.c.l.b16 %v376
    %v390 = vunpack.c.l.b16 %v377
    %v391 = vunpack.c.l.b16 %v378
    %v392 = vpack.c.b16 %v389, %v388
    %v393 = vpack.c.b16 %v391, %v390
    %v397 = vsel %vm334, %v374, 0
    %399 = vmatprep.subr.bf16.mxu0 0
    %400 = vmatpush1.bf16.msra.mxu0 0
    %401 = vmatprep.subr.bf16.mxu0 0
    %402 = vmatpush1.bf16.msra.mxu0 0
    %403 = vmatprep.subr.bf16.mxu0 0
    %404 = vmatpush1.bf16.msra.mxu0 0
    %405 = vmatprep.subr.bf16.mxu0 0
    %406 = vmatpush1.bf16.msra.mxu0 0
    %407 = vmatprep.subr.bf16.mxu0 0
    %408 = vmatpush1.bf16.msra.mxu0 0
    %409 = vmatprep.subr.bf16.mxu0 0
    %410 = vmatpush1.bf16.msra.mxu0 0
    %411 = vmatprep.subr.bf16.mxu0 0
    %412 = vmatpush1.bf16.msra.mxu0 %v393
    %413 = vmatprep.subr.bf16.mxu0 0
    %414 = vmatpush1.bf16.msra.mxu0 %v392
    %415 = vmatprep.subr.bf16.mxu0 0
    %416 = vmatpush2.bf16.msra.mxu0 0
    %417 = vmatprep.subr.bf16.mxu0 0
    %418 = vmatpush2.bf16.msra.mxu0 0
    %419 = vmatprep.subr.bf16.mxu0 0
    %420 = vmatpush2.bf16.msra.mxu0 0
    %421 = vmatprep.subr.bf16.mxu0 0
    %422 = vmatpush2.bf16.msra.mxu0 0
    %423 = vmatprep.subr.bf16.mxu0 0
    %424 = vmatpush2.bf16.msra.mxu0 0
    %425 = vmatprep.subr.bf16.mxu0 0
    %426 = vmatpush2.bf16.msra.mxu0 0
    %427 = vmatprep.subr.bf16.mxu0 0
    %428 = vmatpush2.bf16.msra.mxu0 0
    %429 = vmatprep.subr.bf16.mxu0 0
    %430 = vmatpush2.bf16.msra.mxu0 0
    %431 = vmatprep.mubr.bf16.mxu0 0
    %432 = vmatmul.mubr.bf16.gmra.mxu0 %v397
    %v433 = vpop.f32.mrf.mxu0
    %v434 = vadd.f32 %v383, %v433
    %v435 = vpop.f32.mrf.mxu0
    %v436 = vpop.f32.mrf.mxu0
    %v437 = vadd.f32 %v383, %v436
    %v438 = vpop.f32.mrf.mxu0
    %439 = vdwg.mxu0
    %vm440 = vcmask 785408
    %441 = vst.msk [vmem:[#allocation2] sm:$0xff] %vm440, %v434
    %442 = vst.msk [vmem:[#allocation2 + $0x8] sm:$0xff] %vm440, %v437
    %v443 = vld [vmem:[#allocation2] sm:$0xff]
    %v444 = vld [vmem:[#allocation2 + $0x8] sm:$0xff]
    %447 = vrot.lane.b32.xlu0 %v443, 96
    %v448 = vpop.permute.xlu0 %447
    %449 = vrot.lane.b32.xlu0 %v444, 96
    %v450 = vpop.permute.xlu0 %449
    %v451 = vsel %vm90, %v443, 0
    %v453 = vsel %vm90, %v444, 0
    %v455 = vsel %vm90, %v448, 0
    %v457 = vsel %vm90, %v450, 0
    %459 = vmatprep.subr.mxu0 0.0
    %460 = vmatpush1.xpose.msra.mxu0 0.0
    %461 = vmatprep.subr.mxu0 0.0
    %462 = vmatpush1.xpose.msra.mxu0 0.0
    %463 = vmatprep.subr.mxu0 0.0
    %464 = vmatpush1.xpose.msra.mxu0 0.0
    %465 = vmatprep.subr.mxu0 0.0
    %466 = vmatpush1.xpose.msra.mxu0 0.0
    %467 = vmatprep.subr.mxu0 0.0
    %468 = vmatpush1.xpose.msra.mxu0 0.0
    %469 = vmatprep.subr.mxu0 0.0
    %470 = vmatpush1.xpose.msra.mxu0 0.0
    %471 = vmatprep.subr.mxu0 0.0
    %472 = vmatpush1.xpose.msra.mxu0 0.0
    %473 = vmatprep.subr.mxu0 0.0
    %474 = vmatpush1.xpose.msra.mxu0 0.0
    %475 = vmatprep.subr.mxu0 0.0
    %476 = vmatpush1.xpose.msra.mxu0 0.0
    %477 = vmatprep.subr.mxu0 0.0
    %478 = vmatpush1.xpose.msra.mxu0 0.0
    %479 = vmatprep.subr.mxu0 0.0
    %480 = vmatpush1.xpose.msra.mxu0 0.0
    %481 = vmatprep.subr.mxu0 0.0
    %482 = vmatpush1.xpose.msra.mxu0 0.0
    %483 = vmatprep.subr.mxu0 0.0
    %484 = vmatpush1.xpose.msra.mxu0 0.0
    %485 = vmatprep.subr.mxu0 0.0
    %486 = vmatpush1.xpose.msra.mxu0 0.0
    %487 = vmatprep.subr.mxu0 0.0
    %488 = vmatpush1.xpose.msra.mxu0 %v457
    %489 = vmatprep.subr.mxu0 0.0
    %490 = vmatpush1.xpose.msra.mxu0 %v455
    %491 = vmatprep.subr.mxu0 0.0
    %492 = vmatpush2.xpose.msra.mxu0 0.0
    %493 = vmatprep.subr.mxu0 0.0
    %494 = vmatpush2.xpose.msra.mxu0 0.0
    %495 = vmatprep.subr.mxu0 0.0
    %496 = vmatpush2.xpose.msra.mxu0 0.0
    %497 = vmatprep.subr.mxu0 0.0
    %498 = vmatpush2.xpose.msra.mxu0 0.0
    %499 = vmatprep.subr.mxu0 0.0
    %500 = vmatpush2.xpose.msra.mxu0 0.0
    %501 = vmatprep.subr.mxu0 0.0
    %502 = vmatpush2.xpose.msra.mxu0 0.0
    %503 = vmatprep.subr.mxu0 0.0
    %504 = vmatpush2.xpose.msra.mxu0 0.0
    %505 = vmatprep.subr.mxu0 0.0
    %506 = vmatpush2.xpose.msra.mxu0 0.0
    %507 = vmatprep.subr.mxu0 0.0
    %508 = vmatpush2.xpose.msra.mxu0 0.0
    %509 = vmatprep.subr.mxu0 0.0
    %510 = vmatpush2.xpose.msra.mxu0 0.0
    %511 = vmatprep.subr.mxu0 0.0
    %512 = vmatpush2.xpose.msra.mxu0 0.0
    %513 = vmatprep.subr.mxu0 0.0
    %514 = vmatpush2.xpose.msra.mxu0 0.0
    %515 = vmatprep.subr.mxu0 0.0
    %516 = vmatpush2.xpose.msra.mxu0 0.0
    %517 = vmatprep.subr.mxu0 0.0
    %518 = vmatpush2.xpose.msra.mxu0 0.0
    %519 = vmatprep.subr.mxu0 0.0
    %520 = vmatpush2.xpose.msra.mxu0 0.0
    %521 = vmatprep.subr.mxu0 0.0
    %522 = vmatpush2.xpose.msra.mxu0 0.0
    %523 = vmatprep.mubr.f32.mxu0 0.0
    %524 = vmatmul.mubr.f32.gmra.mxu0 %v451
    %v525 = vpop.f32.mrf.mxu0
    %v526 = vadd.f32 0.0, %v525
    %v527 = vpop.f32.mrf.mxu0
    %528 = vmatprep.mubr.f32.mxu0 0.0
    %529 = vmatmul.mubr.f32.gmra.mxu0 %v453
    %v530 = vpop.f32.mrf.mxu0
    %v531 = vadd.f32 0.0, %v530
    %v532 = vpop.f32.mrf.mxu0
    %533 = vdwg.mxu0
    %v534 = vmul.f32 %v526, 0.25
    %v535 = vmul.f32 %v531, 0.25
    %v536 = vadd.f32 %v534, %v328
    %v537 = vadd.f32 %v535, %v329
    %v538 = vsel %vm90, %v536, -inf
    %539 = vmax.xlane.f32.xlu0 %v538
    %v540 = vpop.xlane.xlu0 %539
    %v541 = vsel %vm90, %v537, -inf
    %542 = vmax.xlane.f32.xlu0 %v541
    %v543 = vpop.xlane.xlu0 %542
    %v544 = vsub.f32 %v536, %v540
    %v545 = vsub.f32 %v537, %v543
    %v546 = vmul.f32 %v544, 1.442695
    %v547 = vpow.pop %v546
    %v548 = vmul.f32 %v545, 1.442695
    %v549 = vpow.pop %v548
    %v550 = vsel %vm90, %v547, 0.0
    %551 = vadd.xlane.f32.xlu0 %v550
    %v552 = vpop.xlane.xlu0 %551
    %v553 = vsel %vm90, %v549, 0.0
    %554 = vadd.xlane.f32.xlu0 %v553
    %v555 = vpop.xlane.xlu0 %554
    %v556 = vrcp.pop %v552
    %v557 = vrcp.pop %v555
    %v558 = vmul.f32 %v547, %v556
    %v559 = vmul.f32 %v549, %v557
    %560 = vrot.lane.b32.xlu0 %v443, 64
    %v561 = vpop.permute.xlu0 %560
    %562 = vrot.lane.b32.xlu0 %v444, 64
    %v563 = vpop.permute.xlu0 %562
    %v567 = vsel %vm90, %v558, 0
    %v570 = vsel %vm90, %v559, 0
    %572 = vmatprep.subr.mxu0 0.0
    %573 = vmatpush1.msra.mxu0 0.0
    %574 = vmatprep.subr.mxu0 0.0
    %575 = vmatpush1.msra.mxu0 0.0
    %576 = vmatprep.subr.mxu0 0.0
    %577 = vmatpush1.msra.mxu0 0.0
    %578 = vmatprep.subr.mxu0 0.0
    %579 = vmatpush1.msra.mxu0 0.0
    %580 = vmatprep.subr.mxu0 0.0
    %581 = vmatpush1.msra.mxu0 0.0
    %582 = vmatprep.subr.mxu0 0.0
    %583 = vmatpush1.msra.mxu0 0.0
    %584 = vmatprep.subr.mxu0 0.0
    %585 = vmatpush1.msra.mxu0 0.0
    %586 = vmatprep.subr.mxu0 0.0
    %587 = vmatpush1.msra.mxu0 0.0
    %588 = vmatprep.subr.mxu0 0.0
    %589 = vmatpush1.msra.mxu0 0.0
    %590 = vmatprep.subr.mxu0 0.0
    %591 = vmatpush1.msra.mxu0 0.0
    %592 = vmatprep.subr.mxu0 0.0
    %593 = vmatpush1.msra.mxu0 0.0
    %594 = vmatprep.subr.mxu0 0.0
    %595 = vmatpush1.msra.mxu0 0.0
    %596 = vmatprep.subr.mxu0 0.0
    %597 = vmatpush1.msra.mxu0 0.0
    %598 = vmatprep.subr.mxu0 0.0
    %599 = vmatpush1.msra.mxu0 0.0
    %600 = vmatprep.subr.mxu0 0.0
    %601 = vmatpush1.msra.mxu0 %v563
    %602 = vmatprep.subr.mxu0 0.0
    %603 = vmatpush1.msra.mxu0 %v561
    %604 = vmatprep.subr.mxu0 0.0
    %605 = vmatpush2.msra.mxu0 0.0
    %606 = vmatprep.subr.mxu0 0.0
    %607 = vmatpush2.msra.mxu0 0.0
    %608 = vmatprep.subr.mxu0 0.0
    %609 = vmatpush2.msra.mxu0 0.0
    %610 = vmatprep.subr.mxu0 0.0
    %611 = vmatpush2.msra.mxu0 0.0
    %612 = vmatprep.subr.mxu0 0.0
    %613 = vmatpush2.msra.mxu0 0.0
    %614 = vmatprep.subr.mxu0 0.0
    %615 = vmatpush2.msra.mxu0 0.0
    %616 = vmatprep.subr.mxu0 0.0
    %617 = vmatpush2.msra.mxu0 0.0
    %618 = vmatprep.subr.mxu0 0.0
    %619 = vmatpush2.msra.mxu0 0.0
    %620 = vmatprep.subr.mxu0 0.0
    %621 = vmatpush2.msra.mxu0 0.0
    %622 = vmatprep.subr.mxu0 0.0
    %623 = vmatpush2.msra.mxu0 0.0
    %624 = vmatprep.subr.mxu0 0.0
    %625 = vmatpush2.msra.mxu0 0.0
    %626 = vmatprep.subr.mxu0 0.0
    %627 = vmatpush2.msra.mxu0 0.0
    %628 = vmatprep.subr.mxu0 0.0
    %629 = vmatpush2.msra.mxu0 0.0
    %630 = vmatprep.subr.mxu0 0.0
    %631 = vmatpush2.msra.mxu0 0.0
    %632 = vmatprep.subr.mxu0 0.0
    %633 = vmatpush2.msra.mxu0 0.0
    %634 = vmatprep.subr.mxu0 0.0
    %635 = vmatpush2.msra.mxu0 0.0
    %636 = vmatprep.mubr.f32.mxu0 0.0
    %637 = vmatmul.mubr.f32.gmra.mxu0 %v567
    %v638 = vpop.f32.mrf.mxu0
    %v639 = vadd.f32 0.0, %v638
    %v640 = vpop.f32.mrf.mxu0
    %641 = vmatprep.mubr.f32.mxu0 0.0
    %642 = vmatmul.mubr.f32.gmra.mxu0 %v570
    %v643 = vpop.f32.mrf.mxu0
    %v644 = vadd.f32 0.0, %v643
    %v645 = vpop.f32.mrf.mxu0
    %646 = vdwg.mxu0
    %v647 = vld [vmem:[#allocation8 + $0x138] sm:$0xf]
    %v648 = vld [vmem:[#allocation8 + $0x144] sm:$0xf]
    %v649 = vpack.c.bf16 %v644, %v639
    %650 = vrot.lane.b32.xlu0 %v443, 112
    %v651 = vpop.permute.xlu0 %650
    %652 = vrot.lane.b32.xlu0 %v444, 112
    %v653 = vpop.permute.xlu0 %652
    %654 = vrot.lane.b32.xlu0 %v443, 80
    %v655 = vpop.permute.xlu0 %654
    %656 = vrot.lane.b32.xlu0 %v444, 80
    %v657 = vpop.permute.xlu0 %656
    %v658 = vsel %vm90, %v651, 0
    %v660 = vsel %vm90, %v653, 0
    %v662 = vsel %vm90, %v655, 0
    %v664 = vsel %vm90, %v657, 0
    %666 = vmatprep.subr.mxu0 0.0
    %667 = vmatpush1.xpose.msra.mxu0 0.0
    %668 = vmatprep.subr.mxu0 0.0
    %669 = vmatpush1.xpose.msra.mxu0 0.0
    %670 = vmatprep.subr.mxu0 0.0
    %671 = vmatpush1.xpose.msra.mxu0 0.0
    %672 = vmatprep.subr.mxu0 0.0
    %673 = vmatpush1.xpose.msra.mxu0 0.0
    %674 = vmatprep.subr.mxu0 0.0
    %675 = vmatpush1.xpose.msra.mxu0 0.0
    %676 = vmatprep.subr.mxu0 0.0
    %677 = vmatpush1.xpose.msra.mxu0 0.0
    %678 = vmatprep.subr.mxu0 0.0
    %679 = vmatpush1.xpose.msra.mxu0 0.0
    %680 = vmatprep.subr.mxu0 0.0
    %681 = vmatpush1.xpose.msra.mxu0 0.0
    %682 = vmatprep.subr.mxu0 0.0
    %683 = vmatpush1.xpose.msra.mxu0 0.0
    %684 = vmatprep.subr.mxu0 0.0
    %685 = vmatpush1.xpose.msra.mxu0 0.0
    %686 = vmatprep.subr.mxu0 0.0
    %687 = vmatpush1.xpose.msra.mxu0 0.0
    %688 = vmatprep.subr.mxu0 0.0
    %689 = vmatpush1.xpose.msra.mxu0 0.0
    %690 = vmatprep.subr.mxu0 0.0
    %691 = vmatpush1.xpose.msra.mxu0 0.0
    %692 = vmatprep.subr.mxu0 0.0
    %693 = vmatpush1.xpose.msra.mxu0 0.0
    %694 = vmatprep.subr.mxu0 0.0
    %695 = vmatpush1.xpose.msra.mxu0 %v664
    %696 = vmatprep.subr.mxu0 0.0
    %697 = vmatpush1.xpose.msra.mxu0 %v662
    %698 = vmatprep.subr.mxu0 0.0
    %699 = vmatpush2.xpose.msra.mxu0 0.0
    %700 = vmatprep.subr.mxu0 0.0
    %701 = vmatpush2.xpose.msra.mxu0 0.0
    %702 = vmatprep.subr.mxu0 0.0
    %703 = vmatpush2.xpose.msra.mxu0 0.0
    %704 = vmatprep.subr.mxu0 0.0
    %705 = vmatpush2.xpose.msra.mxu0 0.0
    %706 = vmatprep.subr.mxu0 0.0
    %707 = vmatpush2.xpose.msra.mxu0 0.0
    %708 = vmatprep.subr.mxu0 0.0
    %709 = vmatpush2.xpose.msra.mxu0 0.0
    %710 = vmatprep.subr.mxu0 0.0
    %711 = vmatpush2.xpose.msra.mxu0 0.0
    %712 = vmatprep.subr.mxu0 0.0
    %713 = vmatpush2.xpose.msra.mxu0 0.0
    %714 = vmatprep.subr.mxu0 0.0
    %715 = vmatpush2.xpose.msra.mxu0 0.0
    %716 = vmatprep.subr.mxu0 0.0
    %717 = vmatpush2.xpose.msra.mxu0 0.0
    %718 = vmatprep.subr.mxu0 0.0
    %719 = vmatpush2.xpose.msra.mxu0 0.0
    %720 = vmatprep.subr.mxu0 0.0
    %721 = vmatpush2.xpose.msra.mxu0 0.0
    %722 = vmatprep.subr.mxu0 0.0
    %723 = vmatpush2.xpose.msra.mxu0 0.0
    %724 = vmatprep.subr.mxu0 0.0
    %725 = vmatpush2.xpose.msra.mxu0 0.0
    %726 = vmatprep.subr.mxu0 0.0
    %727 = vmatpush2.xpose.msra.mxu0 0.0
    %728 = vmatprep.subr.mxu0 0.0
    %729 = vmatpush2.xpose.msra.mxu0 0.0
    %730 = vmatprep.mubr.f32.mxu0 0.0
    %731 = vmatmul.mubr.f32.gmra.mxu0 %v658
    %v732 = vpop.f32.mrf.mxu0
    %v733 = vadd.f32 0.0, %v732
    %v734 = vpop.f32.mrf.mxu0
    %735 = vmatprep.mubr.f32.mxu0 0.0
    %736 = vmatmul.mubr.f32.gmra.mxu0 %v660
    %v737 = vpop.f32.mrf.mxu0
    %v738 = vadd.f32 0.0, %v737
    %v739 = vpop.f32.mrf.mxu0
    %740 = vdwg.mxu0
    %v741 = vmul.f32 %v733, 0.25
    %v742 = vmul.f32 %v738, 0.25
    %v743 = vadd.f32 %v741, %v328
    %v744 = vadd.f32 %v742, %v329
    %v745 = vsel %vm90, %v743, -inf
    %746 = vmax.xlane.f32.xlu0 %v745
    %v747 = vpop.xlane.xlu0 %746
    %v748 = vsel %vm90, %v744, -inf
    %749 = vmax.xlane.f32.xlu0 %v748
    %v750 = vpop.xlane.xlu0 %749
    %v751 = vsub.f32 %v743, %v747
    %v752 = vsub.f32 %v744, %v750
    %v753 = vmul.f32 %v751, 1.442695
    %v754 = vpow.pop %v753
    %v755 = vmul.f32 %v752, 1.442695
    %v756 = vpow.pop %v755
    %v757 = vsel %vm90, %v754, 0.0
    %758 = vadd.xlane.f32.xlu0 %v757
    %v759 = vpop.xlane.xlu0 %758
    %v760 = vsel %vm90, %v756, 0.0
    %761 = vadd.xlane.f32.xlu0 %v760
    %v762 = vpop.xlane.xlu0 %761
    %v763 = vrcp.pop %v759
    %v764 = vrcp.pop %v762
    %v765 = vmul.f32 %v754, %v763
    %v766 = vmul.f32 %v756, %v764
    %767 = vrot.lane.b32.xlu0 %v443, 48
    %v768 = vpop.permute.xlu0 %767
    %769 = vrot.lane.b32.xlu0 %v444, 48
    %v770 = vpop.permute.xlu0 %769
    %v774 = vsel %vm90, %v765, 0
    %v777 = vsel %vm90, %v766, 0
    %779 = vmatprep.subr.mxu0 0.0
    %780 = vmatpush1.msra.mxu0 0.0
    %781 = vmatprep.subr.mxu0 0.0
    %782 = vmatpush1.msra.mxu0 0.0
    %783 = vmatprep.subr.mxu0 0.0
    %784 = vmatpush1.msra.mxu0 0.0
    %785 = vmatprep.subr.mxu0 0.0
    %786 = vmatpush1.msra.mxu0 0.0
    %787 = vmatprep.subr.mxu0 0.0
    %788 = vmatpush1.msra.mxu0 0.0
    %789 = vmatprep.subr.mxu0 0.0
    %790 = vmatpush1.msra.mxu0 0.0
    %791 = vmatprep.subr.mxu0 0.0
    %792 = vmatpush1.msra.mxu0 0.0
    %793 = vmatprep.subr.mxu0 0.0
    %794 = vmatpush1.msra.mxu0 0.0
    %795 = vmatprep.subr.mxu0 0.0
    %796 = vmatpush1.msra.mxu0 0.0
    %797 = vmatprep.subr.mxu0 0.0
    %798 = vmatpush1.msra.mxu0 0.0
    %799 = vmatprep.subr.mxu0 0.0
    %800 = vmatpush1.msra.mxu0 0.0
    %801 = vmatprep.subr.mxu0 0.0
    %802 = vmatpush1.msra.mxu0 0.0
    %803 = vmatprep.subr.mxu0 0.0
    %804 = vmatpush1.msra.mxu0 0.0
    %805 = vmatprep.subr.mxu0 0.0
    %806 = vmatpush1.msra.mxu0 0.0
    %807 = vmatprep.subr.mxu0 0.0
    %808 = vmatpush1.msra.mxu0 %v770
    %809 = vmatprep.subr.mxu0 0.0
    %810 = vmatpush1.msra.mxu0 %v768
    %811 = vmatprep.subr.mxu0 0.0
    %812 = vmatpush2.msra.mxu0 0.0
    %813 = vmatprep.subr.mxu0 0.0
    %814 = vmatpush2.msra.mxu0 0.0
    %815 = vmatprep.subr.mxu0 0.0
    %816 = vmatpush2.msra.mxu0 0.0
    %817 = vmatprep.subr.mxu0 0.0
    %818 = vmatpush2.msra.mxu0 0.0
    %819 = vmatprep.subr.mxu0 0.0
    %820 = vmatpush2.msra.mxu0 0.0
    %821 = vmatprep.subr.mxu0 0.0
    %822 = vmatpush2.msra.mxu0 0.0
    %823 = vmatprep.subr.mxu0 0.0
    %824 = vmatpush2.msra.mxu0 0.0
    %825 = vmatprep.subr.mxu0 0.0
    %826 = vmatpush2.msra.mxu0 0.0
    %827 = vmatprep.subr.mxu0 0.0
    %828 = vmatpush2.msra.mxu0 0.0
    %829 = vmatprep.subr.mxu0 0.0
    %830 = vmatpush2.msra.mxu0 0.0
    %831 = vmatprep.subr.mxu0 0.0
    %832 = vmatpush2.msra.mxu0 0.0
    %833 = vmatprep.subr.mxu0 0.0
    %834 = vmatpush2.msra.mxu0 0.0
    %835 = vmatprep.subr.mxu0 0.0
    %836 = vmatpush2.msra.mxu0 0.0
    %837 = vmatprep.subr.mxu0 0.0
    %838 = vmatpush2.msra.mxu0 0.0
    %839 = vmatprep.subr.mxu0 0.0
    %840 = vmatpush2.msra.mxu0 0.0
    %841 = vmatprep.subr.mxu0 0.0
    %842 = vmatpush2.msra.mxu0 0.0
    %843 = vmatprep.mubr.f32.mxu0 0.0
    %844 = vmatmul.mubr.f32.gmra.mxu0 %v774
    %v845 = vpop.f32.mrf.mxu0
    %v846 = vadd.f32 0.0, %v845
    %v847 = vpop.f32.mrf.mxu0
    %848 = vmatprep.mubr.f32.mxu0 0.0
    %849 = vmatmul.mubr.f32.gmra.mxu0 %v777
    %v850 = vpop.f32.mrf.mxu0
    %v851 = vadd.f32 0.0, %v850
    %v852 = vpop.f32.mrf.mxu0
    %853 = vdwg.mxu0
    %v854 = vld [vmem:[#allocation8 + $0x150] sm:$0xf]
    %v855 = vld [vmem:[#allocation8 + $0x15c] sm:$0xf]
    %v856 = vpack.c.bf16 %v851, %v846
    %v859 = vunpack.c.l.b16 %v854
    %v860 = vunpack.c.l.b16 %v855
    %v861 = vpack.c.b16 %v860, %v859
    %862 = vrot.lane.b32.xlu0 %v861, 32
    %v863 = vpop.permute.xlu0 %862
    %v866 = vsel %vm90, %v856, 0
    %868 = vmatprep.subr.bf16.mxu0 0
    %869 = vmatpush1.bf16.msra.mxu0 0
    %870 = vmatprep.subr.bf16.mxu0 0
    %871 = vmatpush1.bf16.msra.mxu0 0
    %872 = vmatprep.subr.bf16.mxu0 0
    %873 = vmatpush1.bf16.msra.mxu0 0
    %874 = vmatprep.subr.bf16.mxu0 0
    %875 = vmatpush1.bf16.msra.mxu0 0
    %876 = vmatprep.subr.bf16.mxu0 0
    %877 = vmatpush1.bf16.msra.mxu0 0
    %878 = vmatprep.subr.bf16.mxu0 0
    %879 = vmatpush1.bf16.msra.mxu0 0
    %880 = vmatprep.subr.bf16.mxu0 0
    %881 = vmatpush1.bf16.msra.mxu0 0
    %882 = vmatprep.subr.bf16.mxu0 0
    %883 = vmatpush1.bf16.msra.mxu0 %v863
    %884 = vmatprep.subr.bf16.mxu0 0
    %885 = vmatpush2.bf16.msra.mxu0 0
    %886 = vmatprep.subr.bf16.mxu0 0
    %887 = vmatpush2.bf16.msra.mxu0 0
    %888 = vmatprep.subr.bf16.mxu0 0
    %889 = vmatpush2.bf16.msra.mxu0 0
    %890 = vmatprep.subr.bf16.mxu0 0
    %891 = vmatpush2.bf16.msra.mxu0 0
    %892 = vmatprep.subr.bf16.mxu0 0
    %893 = vmatpush2.bf16.msra.mxu0 0
    %894 = vmatprep.subr.bf16.mxu0 0
    %895 = vmatpush2.bf16.msra.mxu0 0
    %896 = vmatprep.subr.bf16.mxu0 0
    %897 = vmatpush2.bf16.msra.mxu0 0
    %898 = vmatprep.subr.bf16.mxu0 0
    %899 = vmatpush2.bf16.msra.mxu0 0
    %900 = vmatprep.mubr.bf16.mxu0 0
    %901 = vmatmul.mubr.bf16.gmra.mxu0 %v866
    %v902 = vpop.f32.mrf.mxu0
    %v903 = vadd.f32 0.0, %v902
    %v904 = vpop.f32.mrf.mxu0
    %v905 = vpop.f32.mrf.mxu0
    %v906 = vadd.f32 0.0, %v905
    %v907 = vpop.f32.mrf.mxu0
    %908 = vdwg.mxu0
    %v911 = vunpack.c.l.b16 %v647
    %v912 = vunpack.c.l.b16 %v648
    %v913 = vpack.c.b16 %v912, %v911
    %914 = vrot.lane.b32.xlu0 %v913, 32
    %v915 = vpop.permute.xlu0 %914
    %v918 = vsel %vm90, %v649, 0
    %920 = vmatprep.subr.bf16.mxu0 0
    %921 = vmatpush1.bf16.msra.mxu0 0
    %922 = vmatprep.subr.bf16.mxu0 0
    %923 = vmatpush1.bf16.msra.mxu0 0
    %924 = vmatprep.subr.bf16.mxu0 0
    %925 = vmatpush1.bf16.msra.mxu0 0
    %926 = vmatprep.subr.bf16.mxu0 0
    %927 = vmatpush1.bf16.msra.mxu0 0
    %928 = vmatprep.subr.bf16.mxu0 0
    %929 = vmatpush1.bf16.msra.mxu0 0
    %930 = vmatprep.subr.bf16.mxu0 0
    %931 = vmatpush1.bf16.msra.mxu0 0
    %932 = vmatprep.subr.bf16.mxu0 0
    %933 = vmatpush1.bf16.msra.mxu0 0
    %934 = vmatprep.subr.bf16.mxu0 0
    %935 = vmatpush1.bf16.msra.mxu0 %v915
    %936 = vmatprep.subr.bf16.mxu0 0
    %937 = vmatpush2.bf16.msra.mxu0 0
    %938 = vmatprep.subr.bf16.mxu0 0
    %939 = vmatpush2.bf16.msra.mxu0 0
    %940 = vmatprep.subr.bf16.mxu0 0
    %941 = vmatpush2.bf16.msra.mxu0 0
    %942 = vmatprep.subr.bf16.mxu0 0
    %943 = vmatpush2.bf16.msra.mxu0 0
    %944 = vmatprep.subr.bf16.mxu0 0
    %945 = vmatpush2.bf16.msra.mxu0 0
    %946 = vmatprep.subr.bf16.mxu0 0
    %947 = vmatpush2.bf16.msra.mxu0 0
    %948 = vmatprep.subr.bf16.mxu0 0
    %949 = vmatpush2.bf16.msra.mxu0 0
    %950 = vmatprep.subr.bf16.mxu0 0
    %951 = vmatpush2.bf16.msra.mxu0 0
    %952 = vmatprep.mubr.bf16.mxu0 0
    %953 = vmatmul.mubr.bf16.gmra.mxu0 %v918
    %v954 = vpop.f32.mrf.mxu0
    %v955 = vadd.f32 %v903, %v954
    %v956 = vpop.f32.mrf.mxu0
    %v957 = vpop.f32.mrf.mxu0
    %v958 = vadd.f32 %v906, %v957
    %v959 = vpop.f32.mrf.mxu0
    %960 = vdwg.mxu0
    %v961 = vadd.f32 %v330, %v955
    %v962 = vadd.f32 %v331, %v958
    %v963 = vld [vmem:[#allocation9 + $0x10] sm:$0x1]
    %v964 = vlaneseq
    %v965 = vshrl.u32 %v964, 7
    %v966 = vsub.s32 0, %v965
    %v967 = vrot.slane %v963, %v966
    %v968 = vadd.f32 %v961, %v967
    %v969 = vadd.f32 %v962, %v967
    %v970 = vld [vmem:[#allocation9 + $0x8] sm:$0x1]
    %v971 = vld [vmem:[#allocation9 + $0xc] sm:$0x1]
    %v972 = vsel %vm334, %v968, 0.0
    %973 = vadd.xlane.f32.xlu0 %v972
    %v974 = vpop.xlane.xlu0 %973
    %v975 = vsel %vm334, %v969, 0.0
    %976 = vadd.xlane.f32.xlu0 %v975
    %v977 = vpop.xlane.xlu0 %976
    %v978 = vmul.f32 %v974, %v341
    %v979 = vmul.f32 %v977, %v341
    %v980 = vsub.f32 %v968, %v978
    %v981 = vsub.f32 %v969, %v979
    %v982 = vmul.f32 %v980, %v980
    %v983 = vmul.f32 %v981, %v981
    %v984 = vsel %vm334, %v982, 0.0
    %985 = vadd.xlane.f32.xlu0 %v984
    %v986 = vpop.xlane.xlu0 %985
    %v987 = vsel %vm334, %v983, 0.0
    %988 = vadd.xlane.f32.xlu0 %v987
    %v989 = vpop.xlane.xlu0 %988
    %v990 = vmul.f32 %v986, %v341
    %v991 = vmul.f32 %v989, %v341
    %v992 = vadd.f32 %v990, 1e-05
    %v993 = vadd.f32 %v991, 1e-05
    %v994 = vrsqrt.pop %v992
    %v995 = vrsqrt.pop %v993
    %v996 = vmul.f32 %v980, %v994
    %v997 = vmul.f32 %v981, %v995
    %v998 = vlaneseq
    %v999 = vshrl.u32 %v998, 7
    %v1000 = vsub.s32 0, %v999
    %v1001 = vrot.slane %v970, %v1000
    %v1002 = vmul.f32 %v996, %v1001
    %v1003 = vmul.f32 %v997, %v1001
    %v1004 = vlaneseq
    %v1005 = vshrl.u32 %v1004, 7
    %v1006 = vsub.s32 0, %v1005
    %v1007 = vrot.slane %v971, %v1006
    %v1008 = vadd.f32 %v1002, %v1007
    %v1009 = vadd.f32 %v1003, %v1007
    %v1010 = vpack.c.bf16 %v1009, %v1008
    %v1011 = vld [vmem:[#allocation8 + $0x13c] sm:$0xf]
    %v1012 = vld [vmem:[#allocation8 + $0x148] sm:$0xf]
    %v1013 = vld [vmem:[#allocation8 + $0x154] sm:$0xf]
    %v1014 = vld [vmem:[#allocation8 + $0x160] sm:$0xf]
    %v1015 = vld [vmem:[#allocation9 + $0x1c] sm:$0x1]
    %v1016 = vlaneseq
    %v1017 = vshrl.u32 %v1016, 7
    %v1018 = vsub.s32 0, %v1017
    %v1019 = vrot.slane %v1015, %v1018
    %v1024 = vunpack.c.l.b16 %v1011
    %v1025 = vunpack.c.l.b16 %v1012
    %v1026 = vunpack.c.l.b16 %v1013
    %v1027 = vunpack.c.l.b16 %v1014
    %v1028 = vpack.c.b16 %v1025, %v1024
    %v1029 = vpack.c.b16 %v1027, %v1026
    %v1033 = vsel %vm334, %v1010, 0
    %1035 = vmatprep.subr.bf16.mxu0 0
    %1036 = vmatpush1.bf16.msra.mxu0 0
    %1037 = vmatprep.subr.bf16.mxu0 0
    %1038 = vmatpush1.bf16.msra.mxu0 0
    %1039 = vmatprep.subr.bf16.mxu0 0
    %1040 = vmatpush1.bf16.msra.mxu0 0
    %1041 = vmatprep.subr.bf16.mxu0 0
    %1042 = vmatpush1.bf16.msra.mxu0 0
    %1043 = vmatprep.subr.bf16.mxu0 0
    %1044 = vmatpush1.bf16.msra.mxu0 0
    %1045 = vmatprep.subr.bf16.mxu0 0
    %1046 = vmatpush1.bf16.msra.mxu0 0
    %1047 = vmatprep.subr.bf16.mxu0 0
    %1048 = vmatpush1.bf16.msra.mxu0 %v1029
    %1049 = vmatprep.subr.bf16.mxu0 0
    %1050 = vmatpush1.bf16.msra.mxu0 %v1028
    %1051 = vmatprep.subr.bf16.mxu0 0
    %1052 = vmatpush2.bf16.msra.mxu0 0
    %1053 = vmatprep.subr.bf16.mxu0 0
    %1054 = vmatpush2.bf16.msra.mxu0 0
    %1055 = vmatprep.subr.bf16.mxu0 0
    %1056 = vmatpush2.bf16.msra.mxu0 0
    %1057 = vmatprep.subr.bf16.mxu0 0
    %1058 = vmatpush2.bf16.msra.mxu0 0
    %1059 = vmatprep.subr.bf16.mxu0 0
    %1060 = vmatpush2.bf16.msra.mxu0 0
    %1061 = vmatprep.subr.bf16.mxu0 0
    %1062 = vmatpush2.bf16.msra.mxu0 0
    %1063 = vmatprep.subr.bf16.mxu0 0
    %1064 = vmatpush2.bf16.msra.mxu0 0
    %1065 = vmatprep.subr.bf16.mxu0 0
    %1066 = vmatpush2.bf16.msra.mxu0 0
    %1067 = vmatprep.mubr.bf16.mxu0 0
    %1068 = vmatmul.mubr.bf16.gmra.mxu0 %v1033
    %v1069 = vpop.f32.mrf.mxu0
    %v1070 = vadd.f32 %v1019, %v1069
    %v1071 = vpop.f32.mrf.mxu0
    %v1072 = vpop.f32.mrf.mxu0
    %v1073 = vadd.f32 %v1019, %v1072
    %v1074 = vpop.f32.mrf.mxu0
    %1075 = vdwg.mxu0
    %v1076 = vmul.f32 %v1070, %v1070
    %v1077 = vmul.f32 %v1073, %v1073
    %v1078 = vmul.f32 %v1070, %v1076
    %v1079 = vmul.f32 %v1073, %v1077
    %v1080 = vmul.f32 %v1078, 0.044715
    %v1081 = vmul.f32 %v1079, 0.044715
    %v1082 = vadd.f32 %v1070, %v1080
    %v1083 = vadd.f32 %v1073, %v1081
    %v1084 = vmul.f32 %v1082, 0.7978846
    %v1085 = vmul.f32 %v1083, 0.7978846
    %v1086 = vtanh.pop %v1084
    %v1087 = vtanh.pop %v1085
    %v1088 = vadd.f32 %v1086, 1.0
    %v1089 = vadd.f32 %v1087, 1.0
    %v1090 = vmul.f32 %v1088, 0.5
    %v1091 = vmul.f32 %v1089, 0.5
    %v1092 = vmul.f32 %v1070, %v1090
    %v1093 = vmul.f32 %v1073, %v1091
    %v1094 = vpack.c.bf16 %v1093, %v1092
    %v1095 = vld [vmem:[#allocation8 + $0x140] sm:$0xf]
    %v1096 = vld [vmem:[#allocation8 + $0x14c] sm:$0xf]
    %v1097 = vld [vmem:[#allocation8 + $0x158] sm:$0xf]
    %v1098 = vld [vmem:[#allocation8 + $0x164] sm:$0xf]
    %v1103 = vunpack.c.l.b16 %v1095
    %v1104 = vunpack.c.l.b16 %v1096
    %v1105 = vunpack.c.l.b16 %v1097
    %v1106 = vunpack.c.l.b16 %v1098
    %v1107 = vpack.c.b16 %v1104, %v1103
    %v1108 = vpack.c.b16 %v1106, %v1105
    %1111 = vmatprep.subr.bf16.mxu0 0
    %1112 = vmatpush1.bf16.xpose.msra.mxu0 0
    %1113 = vmatprep.subr.bf16.mxu0 0
    %1114 = vmatpush1.bf16.xpose.msra.mxu0 0
    %1115 = vmatprep.subr.bf16.mxu0 0
    %1116 = vmatpush1.bf16.xpose.msra.mxu0 0
    %1117 = vmatprep.subr.bf16.mxu0 0
    %1118 = vmatpush1.bf16.xpose.msra.mxu0 0
    %1119 = vmatprep.subr.bf16.mxu0 0
    %1120 = vmatpush1.bf16.xpose.msra.mxu0 0
    %1121 = vmatprep.subr.bf16.mxu0 0
    %1122 = vmatpush1.bf16.xpose.msra.mxu0 0
    %1123 = vmatprep.subr.bf16.mxu0 0
    %1124 = vmatpush1.bf16.xpose.msra.mxu0 %v1108
    %1125 = vmatprep.subr.bf16.mxu0 0
    %1126 = vmatpush1.bf16.xpose.msra.mxu0 %v1107
    %1127 = vmatprep.subr.bf16.mxu0 0
    %1128 = vmatpush2.bf16.xpose.msra.mxu0 0
    %1129 = vmatprep.subr.bf16.mxu0 0
    %1130 = vmatpush2.bf16.xpose.msra.mxu0 0
    %1131 = vmatprep.subr.bf16.mxu0 0
    %1132 = vmatpush2.bf16.xpose.msra.mxu0 0
    %1133 = vmatprep.subr.bf16.mxu0 0
    %1134 = vmatpush2.bf16.xpose.msra.mxu0 0
    %1135 = vmatprep.subr.bf16.mxu0 0
    %1136 = vmatpush2.bf16.xpose.msra.mxu0 0
    %1137 = vmatprep.subr.bf16.mxu0 0
    %1138 = vmatpush2.bf16.xpose.msra.mxu0 0
    %1139 = vmatprep.subr.bf16.mxu0 0
    %1140 = vmatpush2.bf16.xpose.msra.mxu0 0
    %1141 = vmatprep.subr.bf16.mxu0 0
    %1142 = vmatpush2.bf16.xpose.msra.mxu0 0
    %1143 = vmatprep.mubr.bf16.mxu0 0
    %1144 = vmatmul.mubr.bf16.gmra.mxu0 %v1094
    %v1145 = vpop.f32.mrf.mxu0
    %v1146 = vadd.f32 0.0, %v1145
    %v1147 = vpop.f32.mrf.mxu0
    %v1148 = vpop.f32.mrf.mxu0
    %v1149 = vadd.f32 0.0, %v1148
    %v1150 = vpop.f32.mrf.mxu0
    %1151 = vdwg.mxu0
    %v1152 = vadd.f32 %v968, %v1146
    %v1153 = vadd.f32 %v969, %v1149
    %v1154 = vld [vmem:[#allocation9 + $0x14] sm:$0x1]
    %v1155 = vlaneseq
    %v1156 = vshrl.u32 %v1155, 7
    %v1157 = vsub.s32 0, %v1156
    %v1158 = vrot.slane %v1154, %v1157
    %v1159 = vadd.f32 %v1152, %v1158
    %v1160 = vadd.f32 %v1153, %v1158
    %v1161 = vld [vmem:[#allocation9 + $0x1] sm:$0x1]
    %v1162 = vld [vmem:[#allocation9 + $0x5] sm:$0x1]
    %v1163 = vsel %vm334, %v1159, 0.0
    %1164 = vadd.xlane.f32.xlu0 %v1163
    %v1165 = vpop.xlane.xlu0 %1164
    %v1166 = vsel %vm334, %v1160, 0.0
    %1167 = vadd.xlane.f32.xlu0 %v1166
    %v1168 = vpop.xlane.xlu0 %1167
    %v1169 = vmul.f32 %v1165, %v341
    %v1170 = vmul.f32 %v1168, %v341
    %v1171 = vsub.f32 %v1159, %v1169
    %v1172 = vsub.f32 %v1160, %v1170
    %v1173 = vmul.f32 %v1171, %v1171
    %v1174 = vmul.f32 %v1172, %v1172
    %v1175 = vsel %vm334, %v1173, 0.0
    %1176 = vadd.xlane.f32.xlu0 %v1175
    %v1177 = vpop.xlane.xlu0 %1176
    %v1178 = vsel %vm334, %v1174, 0.0
    %1179 = vadd.xlane.f32.xlu0 %v1178
    %v1180 = vpop.xlane.xlu0 %1179
    %v1181 = vmul.f32 %v1177, %v341
    %v1182 = vmul.f32 %v1180, %v341
    %v1183 = vadd.f32 %v1181, 1e-05
    %v1184 = vadd.f32 %v1182, 1e-05
    %v1185 = vrsqrt.pop %v1183
    %v1186 = vrsqrt.pop %v1184
    %v1187 = vmul.f32 %v1171, %v1185
    %v1188 = vmul.f32 %v1172, %v1186
    %v1189 = vlaneseq
    %v1190 = vshrl.u32 %v1189, 7
    %v1191 = vsub.s32 0, %v1190
    %v1192 = vrot.slane %v1161, %v1191
    %v1193 = vmul.f32 %v1187, %v1192
    %v1194 = vmul.f32 %v1188, %v1192
    %v1195 = vlaneseq
    %v1196 = vshrl.u32 %v1195, 7
    %v1197 = vsub.s32 0, %v1196
    %v1198 = vrot.slane %v1162, %v1197
    %v1199 = vadd.f32 %v1193, %v1198
    %v1200 = vadd.f32 %v1194, %v1198
    %v1201 = vpack.c.bf16 %v1200, %v1199
    %v1202 = vld [vmem:[#allocation8 + $0x168] sm:$0xf]
    %v1203 = vld [vmem:[#allocation8 + $0x174] sm:$0xf]
    %v1204 = vld [vmem:[#allocation8 + $0x180] sm:$0xf]
    %v1205 = vld [vmem:[#allocation8 + $0x18c] sm:$0xf]
    %v1206 = vld [vmem:[#allocation9 + $0x19] sm:$0x1]
    %v1207 = vlaneseq
    %v1208 = vshrl.u32 %v1207, 7
    %v1209 = vsub.s32 0, %v1208
    %v1210 = vrot.slane %v1206, %v1209
    %v1215 = vunpack.c.l.b16 %v1202
    %v1216 = vunpack.c.l.b16 %v1203
    %v1217 = vunpack.c.l.b16 %v1204
    %v1218 = vunpack.c.l.b16 %v1205
    %v1219 = vpack.c.b16 %v1216, %v1215
    %v1220 = vpack.c.b16 %v1218, %v1217
    %v1224 = vsel %vm334, %v1201, 0
    %1226 = vmatprep.subr.bf16.mxu0 0
    %1227 = vmatpush1.bf16.msra.mxu0 0
    %1228 = vmatprep.subr.bf16.mxu0 0
    %1229 = vmatpush1.bf16.msra.mxu0 0
    %1230 = vmatprep.subr.bf16.mxu0 0
    %1231 = vmatpush1.bf16.msra.mxu0 0
    %1232 = vmatprep.subr.bf16.mxu0 0
    %1233 = vmatpush1.bf16.msra.mxu0 0
    %1234 = vmatprep.subr.bf16.mxu0 0
    %1235 = vmatpush1.bf16.msra.mxu0 0
    %1236 = vmatprep.subr.bf16.mxu0 0
    %1237 = vmatpush1.bf16.msra.mxu0 0
    %1238 = vmatprep.subr.bf16.mxu0 0
    %1239 = vmatpush1.bf16.msra.mxu0 %v1220
    %1240 = vmatprep.subr.bf16.mxu0 0
    %1241 = vmatpush1.bf16.msra.mxu0 %v1219
    %1242 = vmatprep.subr.bf16.mxu0 0
    %1243 = vmatpush2.bf16.msra.mxu0 0
    %1244 = vmatprep.subr.bf16.mxu0 0
    %1245 = vmatpush2.bf16.msra.mxu0 0
    %1246 = vmatprep.subr.bf16.mxu0 0
    %1247 = vmatpush2.bf16.msra.mxu0 0
    %1248 = vmatprep.subr.bf16.mxu0 0
    %1249 = vmatpush2.bf16.msra.mxu0 0
    %1250 = vmatprep.subr.bf16.mxu0 0
    %1251 = vmatpush2.bf16.msra.mxu0 0
    %1252 = vmatprep.subr.bf16.mxu0 0
    %1253 = vmatpush2.bf16.msra.mxu0 0
    %1254 = vmatprep.subr.bf16.mxu0 0
    %1255 = vmatpush2.bf16.msra.mxu0 0
    %1256 = vmatprep.subr.bf16.mxu0 0
    %1257 = vmatpush2.bf16.msra.mxu0 0
    %1258 = vmatprep.mubr.bf16.mxu0 0
    %1259 = vmatmul.mubr.bf16.gmra.mxu0 %v1224
    %v1260 = vpop.f32.mrf.mxu0
    %v1261 = vadd.f32 %v1210, %v1260
    %v1262 = vpop.f32.mrf.mxu0
    %v1263 = vpop.f32.mrf.mxu0
    %v1264 = vadd.f32 %v1210, %v1263
    %v1265 = vpop.f32.mrf.mxu0
    %1266 = vdwg.mxu0
    %1267 = vst.msk [vmem:[#allocation2] sm:$0xff] %vm440, %v1261
    %1268 = vst.msk [vmem:[#allocation2 + $0x8] sm:$0xff] %vm440, %v1264
    %v1269 = vld [vmem:[#allocation2] sm:$0xff]
    %v1270 = vld [vmem:[#allocation2 + $0x8] sm:$0xff]
    %1273 = vrot.lane.b32.xlu0 %v1269, 96
    %v1274 = vpop.permute.xlu0 %1273
    %1275 = vrot.lane.b32.xlu0 %v1270, 96
    %v1276 = vpop.permute.xlu0 %1275
    %v1277 = vsel %vm90, %v1269, 0
    %v1279 = vsel %vm90, %v1270, 0
    %v1281 = vsel %vm90, %v1274, 0
    %v1283 = vsel %vm90, %v1276, 0
    %1285 = vmatprep.subr.mxu0 0.0
    %1286 = vmatpush1.xpose.msra.mxu0 0.0
    %1287 = vmatprep.subr.mxu0 0.0
    %1288 = vmatpush1.xpose.msra.mxu0 0.0
    %1289 = vmatprep.subr.mxu0 0.0
    %1290 = vmatpush1.xpose.msra.mxu0 0.0
    %1291 = vmatprep.subr.mxu0 0.0
    %1292 = vmatpush1.xpose.msra.mxu0 0.0
    %1293 = vmatprep.subr.mxu0 0.0
    %1294 = vmatpush1.xpose.msra.mxu0 0.0
    %1295 = vmatprep.subr.mxu0 0.0
    %1296 = vmatpush1.xpose.msra.mxu0 0.0
    %1297 = vmatprep.subr.mxu0 0.0
    %1298 = vmatpush1.xpose.msra.mxu0 0.0
    %1299 = vmatprep.subr.mxu0 0.0
    %1300 = vmatpush1.xpose.msra.mxu0 0.0
    %1301 = vmatprep.subr.mxu0 0.0
    %1302 = vmatpush1.xpose.msra.mxu0 0.0
    %1303 = vmatprep.subr.mxu0 0.0
    %1304 = vmatpush1.xpose.msra.mxu0 0.0
    %1305 = vmatprep.subr.mxu0 0.0
    %1306 = vmatpush1.xpose.msra.mxu0 0.0
    %1307 = vmatprep.subr.mxu0 0.0
    %1308 = vmatpush1.xpose.msra.mxu0 0.0
    %1309 = vmatprep.subr.mxu0 0.0
    %1310 = vmatpush1.xpose.msra.mxu0 0.0
    %1311 = vmatprep.subr.mxu0 0.0
    %1312 = vmatpush1.xpose.msra.mxu0 0.0
    %1313 = vmatprep.subr.mxu0 0.0
    %1314 = vmatpush1.xpose.msra.mxu0 %v1283
    %1315 = vmatprep.subr.mxu0 0.0
    %1316 = vmatpush1.xpose.msra.mxu0 %v1281
    %1317 = vmatprep.subr.mxu0 0.0
    %1318 = vmatpush2.xpose.msra.mxu0 0.0
    %1319 = vmatprep.subr.mxu0 0.0
    %1320 = vmatpush2.xpose.msra.mxu0 0.0
    %1321 = vmatprep.subr.mxu0 0.0
    %1322 = vmatpush2.xpose.msra.mxu0 0.0
    %1323 = vmatprep.subr.mxu0 0.0
    %1324 = vmatpush2.xpose.msra.mxu0 0.0
    %1325 = vmatprep.subr.mxu0 0.0
    %1326 = vmatpush2.xpose.msra.mxu0 0.0
    %1327 = vmatprep.subr.mxu0 0.0
    %1328 = vmatpush2.xpose.msra.mxu0 0.0
    %1329 = vmatprep.subr.mxu0 0.0
    %1330 = vmatpush2.xpose.msra.mxu0 0.0
    %1331 = vmatprep.subr.mxu0 0.0
    %1332 = vmatpush2.xpose.msra.mxu0 0.0
    %1333 = vmatprep.subr.mxu0 0.0
    %1334 = vmatpush2.xpose.msra.mxu0 0.0
    %1335 = vmatprep.subr.mxu0 0.0
    %1336 = vmatpush2.xpose.msra.mxu0 0.0
    %1337 = vmatprep.subr.mxu0 0.0
    %1338 = vmatpush2.xpose.msra.mxu0 0.0
    %1339 = vmatprep.subr.mxu0 0.0
    %1340 = vmatpush2.xpose.msra.mxu0 0.0
    %1341 = vmatprep.subr.mxu0 0.0
    %1342 = vmatpush2.xpose.msra.mxu0 0.0
    %1343 = vmatprep.subr.mxu0 0.0
    %1344 = vmatpush2.xpose.msra.mxu0 0.0
    %1345 = vmatprep.subr.mxu0 0.0
    %1346 = vmatpush2.xpose.msra.mxu0 0.0
    %1347 = vmatprep.subr.mxu0 0.0
    %1348 = vmatpush2.xpose.msra.mxu0 0.0
    %1349 = vmatprep.mubr.f32.mxu0 0.0
    %1350 = vmatmul.mubr.f32.gmra.mxu0 %v1277
    %v1351 = vpop.f32.mrf.mxu0
    %v1352 = vadd.f32 0.0, %v1351
    %v1353 = vpop.f32.mrf.mxu0
    %1354 = vmatprep.mubr.f32.mxu0 0.0
    %1355 = vmatmul.mubr.f32.gmra.mxu0 %v1279
    %v1356 = vpop.f32.mrf.mxu0
    %v1357 = vadd.f32 0.0, %v1356
    %v1358 = vpop.f32.mrf.mxu0
    %1359 = vdwg.mxu0
    %v1360 = vmul.f32 %v1352, 0.25
    %v1361 = vmul.f32 %v1357, 0.25
    %v1362 = vadd.f32 %v1360, %v328
    %v1363 = vadd.f32 %v1361, %v329
    %v1364 = vsel %vm90, %v1362, -inf
    %1365 = vmax.xlane.f32.xlu0 %v1364
    %v1366 = vpop.xlane.xlu0 %1365
    %v1367 = vsel %vm90, %v1363, -inf
    %1368 = vmax.xlane.f32.xlu0 %v1367
    %v1369 = vpop.xlane.xlu0 %1368
    %v1370 = vsub.f32 %v1362, %v1366
    %v1371 = vsub.f32 %v1363, %v1369
    %v1372 = vmul.f32 %v1370, 1.442695
    %v1373 = vpow.pop %v1372
    %v1374 = vmul.f32 %v1371, 1.442695
    %v1375 = vpow.pop %v1374
    %v1376 = vsel %vm90, %v1373, 0.0
    %1377 = vadd.xlane.f32.xlu0 %v1376
    %v1378 = vpop.xlane.xlu0 %1377
    %v1379 = vsel %vm90, %v1375, 0.0
    %1380 = vadd.xlane.f32.xlu0 %v1379
    %v1381 = vpop.xlane.xlu0 %1380
    %v1382 = vrcp.pop %v1378
    %v1383 = vrcp.pop %v1381
    %v1384 = vmul.f32 %v1373, %v1382
    %v1385 = vmul.f32 %v1375, %v1383
    %1386 = vrot.lane.b32.xlu0 %v1269, 64
    %v1387 = vpop.permute.xlu0 %1386
    %1388 = vrot.lane.b32.xlu0 %v1270, 64
    %v1389 = vpop.permute.xlu0 %1388
    %v1393 = vsel %vm90, %v1384, 0
    %v1396 = vsel %vm90, %v1385, 0
    %1398 = vmatprep.subr.mxu0 0.0
    %1399 = vmatpush1.msra.mxu0 0.0
    %1400 = vmatprep.subr.mxu0 0.0
    %1401 = vmatpush1.msra.mxu0 0.0
    %1402 = vmatprep.subr.mxu0 0.0
    %1403 = vmatpush1.msra.mxu0 0.0
    %1404 = vmatprep.subr.mxu0 0.0
    %1405 = vmatpush1.msra.mxu0 0.0
    %1406 = vmatprep.subr.mxu0 0.0
    %1407 = vmatpush1.msra.mxu0 0.0
    %1408 = vmatprep.subr.mxu0 0.0
    %1409 = vmatpush1.msra.mxu0 0.0
    %1410 = vmatprep.subr.mxu0 0.0
    %1411 = vmatpush1.msra.mxu0 0.0
    %1412 = vmatprep.subr.mxu0 0.0
    %1413 = vmatpush1.msra.mxu0 0.0
    %1414 = vmatprep.subr.mxu0 0.0
    %1415 = vmatpush1.msra.mxu0 0.0
    %1416 = vmatprep.subr.mxu0 0.0
    %1417 = vmatpush1.msra.mxu0 0.0
    %1418 = vmatprep.subr.mxu0 0.0
    %1419 = vmatpush1.msra.mxu0 0.0
    %1420 = vmatprep.subr.mxu0 0.0
    %1421 = vmatpush1.msra.mxu0 0.0
    %1422 = vmatprep.subr.mxu0 0.0
    %1423 = vmatpush1.msra.mxu0 0.0
    %1424 = vmatprep.subr.mxu0 0.0
    %1425 = vmatpush1.msra.mxu0 0.0
    %1426 = vmatprep.subr.mxu0 0.0
    %1427 = vmatpush1.msra.mxu0 %v1389
    %1428 = vmatprep.subr.mxu0 0.0
    %1429 = vmatpush1.msra.mxu0 %v1387
    %1430 = vmatprep.subr.mxu0 0.0
    %1431 = vmatpush2.msra.mxu0 0.0
    %1432 = vmatprep.subr.mxu0 0.0
    %1433 = vmatpush2.msra.mxu0 0.0
    %1434 = vmatprep.subr.mxu0 0.0
    %1435 = vmatpush2.msra.mxu0 0.0
    %1436 = vmatprep.subr.mxu0 0.0
    %1437 = vmatpush2.msra.mxu0 0.0
    %1438 = vmatprep.subr.mxu0 0.0
    %1439 = vmatpush2.msra.mxu0 0.0
    %1440 = vmatprep.subr.mxu0 0.0
    %1441 = vmatpush2.msra.mxu0 0.0
    %1442 = vmatprep.subr.mxu0 0.0
    %1443 = vmatpush2.msra.mxu0 0.0
    %1444 = vmatprep.subr.mxu0 0.0
    %1445 = vmatpush2.msra.mxu0 0.0
    %1446 = vmatprep.subr.mxu0 0.0
    %1447 = vmatpush2.msra.mxu0 0.0
    %1448 = vmatprep.subr.mxu0 0.0
    %1449 = vmatpush2.msra.mxu0 0.0
    %1450 = vmatprep.subr.mxu0 0.0
    %1451 = vmatpush2.msra.mxu0 0.0
    %1452 = vmatprep.subr.mxu0 0.0
    %1453 = vmatpush2.msra.mxu0 0.0
    %1454 = vmatprep.subr.mxu0 0.0
    %1455 = vmatpush2.msra.mxu0 0.0
    %1456 = vmatprep.subr.mxu0 0.0
    %1457 = vmatpush2.msra.mxu0 0.0
    %1458 = vmatprep.subr.mxu0 0.0
    %1459 = vmatpush2.msra.mxu0 0.0
    %1460 = vmatprep.subr.mxu0 0.0
    %1461 = vmatpush2.msra.mxu0 0.0
    %1462 = vmatprep.mubr.f32.mxu0 0.0
    %1463 = vmatmul.mubr.f32.gmra.mxu0 %v1393
    %v1464 = vpop.f32.mrf.mxu0
    %v1465 = vadd.f32 0.0, %v1464
    %v1466 = vpop.f32.mrf.mxu0
    %1467 = vmatprep.mubr.f32.mxu0 0.0
    %1468 = vmatmul.mubr.f32.gmra.mxu0 %v1396
    %v1469 = vpop.f32.mrf.mxu0
    %v1470 = vadd.f32 0.0, %v1469
    %v1471 = vpop.f32.mrf.mxu0
    %1472 = vdwg.mxu0
    %v1473 = vld [vmem:[#allocation8 + $0x168] sm:$0xf]
    %v1474 = vld [vmem:[#allocation8 + $0x174] sm:$0xf]
    %v1475 = vpack.c.bf16 %v1470, %v1465
    %1476 = vrot.lane.b32.xlu0 %v1269, 112
    %v1477 = vpop.permute.xlu0 %1476
    %1478 = vrot.lane.b32.xlu0 %v1270, 112
    %v1479 = vpop.permute.xlu0 %1478
    %1480 = vrot.lane.b32.xlu0 %v1269, 80
    %v1481 = vpop.permute.xlu0 %1480
    %1482 = vrot.lane.b32.xlu0 %v1270, 80
    %v1483 = vpop.permute.xlu0 %1482
    %v1484 = vsel %vm90, %v1477, 0
    %v1486 = vsel %vm90, %v1479, 0
    %v1488 = vsel %vm90, %v1481, 0
    %v1490 = vsel %vm90, %v1483, 0
    %1492 = vmatprep.subr.mxu0 0.0
    %1493 = vmatpush1.xpose.msra.mxu0 0.0
    %1494 = vmatprep.subr.mxu0 0.0
    %1495 = vmatpush1.xpose.msra.mxu0 0.0
    %1496 = vmatprep.subr.mxu0 0.0
    %1497 = vmatpush1.xpose.msra.mxu0 0.0
    %1498 = vmatprep.subr.mxu0 0.0
    %1499 = vmatpush1.xpose.msra.mxu0 0.0
    %1500 = vmatprep.subr.mxu0 0.0
    %1501 = vmatpush1.xpose.msra.mxu0 0.0
    %1502 = vmatprep.subr.mxu0 0.0
    %1503 = vmatpush1.xpose.msra.mxu0 0.0
    %1504 = vmatprep.subr.mxu0 0.0
    %1505 = vmatpush1.xpose.msra.mxu0 0.0
    %1506 = vmatprep.subr.mxu0 0.0
    %1507 = vmatpush1.xpose.msra.mxu0 0.0
    %1508 = vmatprep.subr.mxu0 0.0
    %1509 = vmatpush1.xpose.msra.mxu0 0.0
    %1510 = vmatprep.subr.mxu0 0.0
    %1511 = vmatpush1.xpose.msra.mxu0 0.0
    %1512 = vmatprep.subr.mxu0 0.0
    %1513 = vmatpush1.xpose.msra.mxu0 0.0
    %1514 = vmatprep.subr.mxu0 0.0
    %1515 = vmatpush1.xpose.msra.mxu0 0.0
    %1516 = vmatprep.subr.mxu0 0.0
    %1517 = vmatpush1.xpose.msra.mxu0 0.0
    %1518 = vmatprep.subr.mxu0 0.0
    %1519 = vmatpush1.xpose.msra.mxu0 0.0
    %1520 = vmatprep.subr.mxu0 0.0
    %1521 = vmatpush1.xpose.msra.mxu0 %v1490
    %1522 = vmatprep.subr.mxu0 0.0
    %1523 = vmatpush1.xpose.msra.mxu0 %v1488
    %1524 = vmatprep.subr.mxu0 0.0
    %1525 = vmatpush2.xpose.msra.mxu0 0.0
    %1526 = vmatprep.subr.mxu0 0.0
    %1527 = vmatpush2.xpose.msra.mxu0 0.0
    %1528 = vmatprep.subr.mxu0 0.0
    %1529 = vmatpush2.xpose.msra.mxu0 0.0
    %1530 = vmatprep.subr.mxu0 0.0
    %1531 = vmatpush2.xpose.msra.mxu0 0.0
    %1532 = vmatprep.subr.mxu0 0.0
    %1533 = vmatpush2.xpose.msra.mxu0 0.0
    %1534 = vmatprep.subr.mxu0 0.0
    %1535 = vmatpush2.xpose.msra.mxu0 0.0
    %1536 = vmatprep.subr.mxu0 0.0
    %1537 = vmatpush2.xpose.msra.mxu0 0.0
    %1538 = vmatprep.subr.mxu0 0.0
    %1539 = vmatpush2.xpose.msra.mxu0 0.0
    %1540 = vmatprep.subr.mxu0 0.0
    %1541 = vmatpush2.xpose.msra.mxu0 0.0
    %1542 = vmatprep.subr.mxu0 0.0
    %1543 = vmatpush2.xpose.msra.mxu0 0.0
    %1544 = vmatprep.subr.mxu0 0.0
    %1545 = vmatpush2.xpose.msra.mxu0 0.0
    %1546 = vmatprep.subr.mxu0 0.0
    %1547 = vmatpush2.xpose.msra.mxu0 0.0
    %1548 = vmatprep.subr.mxu0 0.0
    %1549 = vmatpush2.xpose.msra.mxu0 0.0
    %1550 = vmatprep.subr.mxu0 0.0
    %1551 = vmatpush2.xpose.msra.mxu0 0.0
    %1552 = vmatprep.subr.mxu0 0.0
    %1553 = vmatpush2.xpose.msra.mxu0 0.0
    %1554 = vmatprep.subr.mxu0 0.0
    %1555 = vmatpush2.xpose.msra.mxu0 0.0
    %1556 = vmatprep.mubr.f32.mxu0 0.0
    %1557 = vmatmul.mubr.f32.gmra.mxu0 %v1484
    %v1558 = vpop.f32.mrf.mxu0
    %v1559 = vadd.f32 0.0, %v1558
    %v1560 = vpop.f32.mrf.mxu0
    %1561 = vmatprep.mubr.f32.mxu0 0.0
    %1562 = vmatmul.mubr.f32.gmra.mxu0 %v1486
    %v1563 = vpop.f32.mrf.mxu0
    %v1564 = vadd.f32 0.0, %v1563
    %v1565 = vpop.f32.mrf.mxu0
    %1566 = vdwg.mxu0
    %v1567 = vmul.f32 %v1559, 0.25
    %v1568 = vmul.f32 %v1564, 0.25
    %v1569 = vadd.f32 %v1567, %v328
    %v1570 = vadd.f32 %v1568, %v329
    %v1571 = vsel %vm90, %v1569, -inf
    %1572 = vmax.xlane.f32.xlu0 %v1571
    %v1573 = vpop.xlane.xlu0 %1572
    %v1574 = vsel %vm90, %v1570, -inf
    %1575 = vmax.xlane.f32.xlu0 %v1574
    %v1576 = vpop.xlane.xlu0 %1575
    %v1577 = vsub.f32 %v1569, %v1573
    %v1578 = vsub.f32 %v1570, %v1576
    %v1579 = vmul.f32 %v1577, 1.442695
    %v1580 = vpow.pop %v1579
    %v1581 = vmul.f32 %v1578, 1.442695
    %v1582 = vpow.pop %v1581
    %v1583 = vsel %vm90, %v1580, 0.0
    %1584 = vadd.xlane.f32.xlu0 %v1583
    %v1585 = vpop.xlane.xlu0 %1584
    %v1586 = vsel %vm90, %v1582, 0.0
    %1587 = vadd.xlane.f32.xlu0 %v1586
    %v1588 = vpop.xlane.xlu0 %1587
    %v1589 = vrcp.pop %v1585
    %v1590 = vrcp.pop %v1588
    %v1591 = vmul.f32 %v1580, %v1589
    %v1592 = vmul.f32 %v1582, %v1590
    %1593 = vrot.lane.b32.xlu0 %v1269, 48
    %v1594 = vpop.permute.xlu0 %1593
    %1595 = vrot.lane.b32.xlu0 %v1270, 48
    %v1596 = vpop.permute.xlu0 %1595
    %v1600 = vsel %vm90, %v1591, 0
    %v1603 = vsel %vm90, %v1592, 0
    %1605 = vmatprep.subr.mxu0 0.0
    %1606 = vmatpush1.msra.mxu0 0.0
    %1607 = vmatprep.subr.mxu0 0.0
    %1608 = vmatpush1.msra.mxu0 0.0
    %1609 = vmatprep.subr.mxu0 0.0
    %1610 = vmatpush1.msra.mxu0 0.0
    %1611 = vmatprep.subr.mxu0 0.0
    %1612 = vmatpush1.msra.mxu0 0.0
    %1613 = vmatprep.subr.mxu0 0.0
    %1614 = vmatpush1.msra.mxu0 0.0
    %1615 = vmatprep.subr.mxu0 0.0
    %1616 = vmatpush1.msra.mxu0 0.0
    %1617 = vmatprep.subr.mxu0 0.0
    %1618 = vmatpush1.msra.mxu0 0.0
    %1619 = vmatprep.subr.mxu0 0.0
    %1620 = vmatpush1.msra.mxu0 0.0
    %1621 = vmatprep.subr.mxu0 0.0
    %1622 = vmatpush1.msra.mxu0 0.0
    %1623 = vmatprep.subr.mxu0 0.0
    %1624 = vmatpush1.msra.mxu0 0.0
    %1625 = vmatprep.subr.mxu0 0.0
    %1626 = vmatpush1.msra.mxu0 0.0
    %1627 = vmatprep.subr.mxu0 0.0
    %1628 = vmatpush1.msra.mxu0 0.0
    %1629 = vmatprep.subr.mxu0 0.0
    %1630 = vmatpush1.msra.mxu0 0.0
    %1631 = vmatprep.subr.mxu0 0.0
    %1632 = vmatpush1.msra.mxu0 0.0
    %1633 = vmatprep.subr.mxu0 0.0
    %1634 = vmatpush1.msra.mxu0 %v1596
    %1635 = vmatprep.subr.mxu0 0.0
    %1636 = vmatpush1.msra.mxu0 %v1594
    %1637 = vmatprep.subr.mxu0 0.0
    %1638 = vmatpush2.msra.mxu0 0.0
    %1639 = vmatprep.subr.mxu0 0.0
    %1640 = vmatpush2.msra.mxu0 0.0
    %1641 = vmatprep.subr.mxu0 0.0
    %1642 = vmatpush2.msra.mxu0 0.0
    %1643 = vmatprep.subr.mxu0 0.0
    %1644 = vmatpush2.msra.mxu0 0.0
    %1645 = vmatprep.subr.mxu0 0.0
    %1646 = vmatpush2.msra.mxu0 0.0
    %1647 = vmatprep.subr.mxu0 0.0
    %1648 = vmatpush2.msra.mxu0 0.0
    %1649 = vmatprep.subr.mxu0 0.0
    %1650 = vmatpush2.msra.mxu0 0.0
    %1651 = vmatprep.subr.mxu0 0.0
    %1652 = vmatpush2.msra.mxu0 0.0
    %1653 = vmatprep.subr.mxu0 0.0
    %1654 = vmatpush2.msra.mxu0 0.0
    %1655 = vmatprep.subr.mxu0 0.0
    %1656 = vmatpush2.msra.mxu0 0.0
    %1657 = vmatprep.subr.mxu0 0.0
    %1658 = vmatpush2.msra.mxu0 0.0
    %1659 = vmatprep.subr.mxu0 0.0
    %1660 = vmatpush2.msra.mxu0 0.0
    %1661 = vmatprep.subr.mxu0 0.0
    %1662 = vmatpush2.msra.mxu0 0.0
    %1663 = vmatprep.subr.mxu0 0.0
    %1664 = vmatpush2.msra.mxu0 0.0
    %1665 = vmatprep.subr.mxu0 0.0
    %1666 = vmatpush2.msra.mxu0 0.0
    %1667 = vmatprep.subr.mxu0 0.0
    %1668 = vmatpush2.msra.mxu0 0.0
    %1669 = vmatprep.mubr.f32.mxu0 0.0
    %1670 = vmatmul.mubr.f32.gmra.mxu0 %v1600
    %v1671 = vpop.f32.mrf.mxu0
    %v1672 = vadd.f32 0.0, %v1671
    %v1673 = vpop.f32.mrf.mxu0
    %1674 = vmatprep.mubr.f32.mxu0 0.0
    %1675 = vmatmul.mubr.f32.gmra.mxu0 %v1603
    %v1676 = vpop.f32.mrf.mxu0
    %v1677 = vadd.f32 0.0, %v1676
    %v1678 = vpop.f32.mrf.mxu0
    %1679 = vdwg.mxu0
    %v1680 = vld [vmem:[#allocation8 + $0x180] sm:$0xf]
    %v1681 = vld [vmem:[#allocation8 + $0x18c] sm:$0xf]
    %v1682 = vpack.c.bf16 %v1677, %v1672
    %v1685 = vunpack.c.l.b16 %v1680
    %v1686 = vunpack.c.l.b16 %v1681
    %v1687 = vpack.c.b16 %v1686, %v1685
    %1688 = vrot.lane.b32.xlu0 %v1687, 32
    %v1689 = vpop.permute.xlu0 %1688
    %v1692 = vsel %vm90, %v1682, 0
    %1694 = vmatprep.subr.bf16.mxu0 0
    %1695 = vmatpush1.bf16.msra.mxu0 0
    %1696 = vmatprep.subr.bf16.mxu0 0
    %1697 = vmatpush1.bf16.msra.mxu0 0
    %1698 = vmatprep.subr.bf16.mxu0 0
    %1699 = vmatpush1.bf16.msra.mxu0 0
    %1700 = vmatprep.subr.bf16.mxu0 0
    %1701 = vmatpush1.bf16.msra.mxu0 0
    %1702 = vmatprep.subr.bf16.mxu0 0
    %1703 = vmatpush1.bf16.msra.mxu0 0
    %1704 = vmatprep.subr.bf16.mxu0 0
    %1705 = vmatpush1.bf16.msra.mxu0 0
    %1706 = vmatprep.subr.bf16.mxu0 0
    %1707 = vmatpush1.bf16.msra.mxu0 0
    %1708 = vmatprep.subr.bf16.mxu0 0
    %1709 = vmatpush1.bf16.msra.mxu0 %v1689
    %1710 = vmatprep.subr.bf16.mxu0 0
    %1711 = vmatpush2.bf16.msra.mxu0 0
    %1712 = vmatprep.subr.bf16.mxu0 0
    %1713 = vmatpush2.bf16.msra.mxu0 0
    %1714 = vmatprep.subr.bf16.mxu0 0
    %1715 = vmatpush2.bf16.msra.mxu0 0
    %1716 = vmatprep.subr.bf16.mxu0 0
    %1717 = vmatpush2.bf16.msra.mxu0 0
    %1718 = vmatprep.subr.bf16.mxu0 0
    %1719 = vmatpush2.bf16.msra.mxu0 0
    %1720 = vmatprep.subr.bf16.mxu0 0
    %1721 = vmatpush2.bf16.msra.mxu0 0
    %1722 = vmatprep.subr.bf16.mxu0 0
    %1723 = vmatpush2.bf16.msra.mxu0 0
    %1724 = vmatprep.subr.bf16.mxu0 0
    %1725 = vmatpush2.bf16.msra.mxu0 0
    %1726 = vmatprep.mubr.bf16.mxu0 0
    %1727 = vmatmul.mubr.bf16.gmra.mxu0 %v1692
    %v1728 = vpop.f32.mrf.mxu0
    %v1729 = vadd.f32 0.0, %v1728
    %v1730 = vpop.f32.mrf.mxu0
    %v1731 = vpop.f32.mrf.mxu0
    %v1732 = vadd.f32 0.0, %v1731
    %v1733 = vpop.f32.mrf.mxu0
    %1734 = vdwg.mxu0
    %v1737 = vunpack.c.l.b16 %v1473
    %v1738 = vunpack.c.l.b16 %v1474
    %v1739 = vpack.c.b16 %v1738, %v1737
    %1740 = vrot.lane.b32.xlu0 %v1739, 32
    %v1741 = vpop.permute.xlu0 %1740
    %v1744 = vsel %vm90, %v1475, 0
    %1746 = vmatprep.subr.bf16.mxu0 0
    %1747 = vmatpush1.bf16.msra.mxu0 0
    %1748 = vmatprep.subr.bf16.mxu0 0
    %1749 = vmatpush1.bf16.msra.mxu0 0
    %1750 = vmatprep.subr.bf16.mxu0 0
    %1751 = vmatpush1.bf16.msra.mxu0 0
    %1752 = vmatprep.subr.bf16.mxu0 0
    %1753 = vmatpush1.bf16.msra.mxu0 0
    %1754 = vmatprep.subr.bf16.mxu0 0
    %1755 = vmatpush1.bf16.msra.mxu0 0
    %1756 = vmatprep.subr.bf16.mxu0 0
    %1757 = vmatpush1.bf16.msra.mxu0 0
    %1758 = vmatprep.subr.bf16.mxu0 0
    %1759 = vmatpush1.bf16.msra.mxu0 0
    %1760 = vmatprep.subr.bf16.mxu0 0
    %1761 = vmatpush1.bf16.msra.mxu0 %v1741
    %1762 = vmatprep.subr.bf16.mxu0 0
    %1763 = vmatpush2.bf16.msra.mxu0 0
    %1764 = vmatprep.subr.bf16.mxu0 0
    %1765 = vmatpush2.bf16.msra.mxu0 0
    %1766 = vmatprep.subr.bf16.mxu0 0
    %1767 = vmatpush2.bf16.msra.mxu0 0
    %1768 = vmatprep.subr.bf16.mxu0 0
    %1769 = vmatpush2.bf16.msra.mxu0 0
    %1770 = vmatprep.subr.bf16.mxu0 0
    %1771 = vmatpush2.bf16.msra.mxu0 0
    %1772 = vmatprep.subr.bf16.mxu0 0
    %1773 = vmatpush2.bf16.msra.mxu0 0
    %1774 = vmatprep.subr.bf16.mxu0 0
    %1775 = vmatpush2.bf16.msra.mxu0 0
    %1776 = vmatprep.subr.bf16.mxu0 0
    %1777 = vmatpush2.bf16.msra.mxu0 0
    %1778 = vmatprep.mubr.bf16.mxu0 0
    %1779 = vmatmul.mubr.bf16.gmra.mxu0 %v1744
    %v1780 = vpop.f32.mrf.mxu0
    %v1781 = vadd.f32 %v1729, %v1780
    %v1782 = vpop.f32.mrf.mxu0
    %v1783 = vpop.f32.mrf.mxu0
    %v1784 = vadd.f32 %v1732, %v1783
    %v1785 = vpop.f32.mrf.mxu0
    %1786 = vdwg.mxu0
    %v1787 = vadd.f32 %v1159, %v1781
    %v1788 = vadd.f32 %v1160, %v1784
    %v1789 = vld [vmem:[#allocation9 + $0x11] sm:$0x1]
    %v1790 = vlaneseq
    %v1791 = vshrl.u32 %v1790, 7
    %v1792 = vsub.s32 0, %v1791
    %v1793 = vrot.slane %v1789, %v1792
    %v1794 = vadd.f32 %v1787, %v1793
    %v1795 = vadd.f32 %v1788, %v1793
    %v1796 = vld [vmem:[#allocation9 + $0x9] sm:$0x1]
    %v1797 = vld [vmem:[#allocation9 + $0xd] sm:$0x1]
    %v1798 = vsel %vm334, %v1794, 0.0
    %1799 = vadd.xlane.f32.xlu0 %v1798
    %v1800 = vpop.xlane.xlu0 %1799
    %v1801 = vsel %vm334, %v1795, 0.0
    %1802 = vadd.xlane.f32.xlu0 %v1801
    %v1803 = vpop.xlane.xlu0 %1802
    %v1804 = vmul.f32 %v1800, %v341
    %v1805 = vmul.f32 %v1803, %v341
    %v1806 = vsub.f32 %v1794, %v1804
    %v1807 = vsub.f32 %v1795, %v1805
    %v1808 = vmul.f32 %v1806, %v1806
    %v1809 = vmul.f32 %v1807, %v1807
    %v1810 = vsel %vm334, %v1808, 0.0
    %1811 = vadd.xlane.f32.xlu0 %v1810
    %v1812 = vpop.xlane.xlu0 %1811
    %v1813 = vsel %vm334, %v1809, 0.0
    %1814 = vadd.xlane.f32.xlu0 %v1813
    %v1815 = vpop.xlane.xlu0 %1814
    %v1816 = vmul.f32 %v1812, %v341
    %v1817 = vmul.f32 %v1815, %v341
    %v1818 = vadd.f32 %v1816, 1e-05
    %v1819 = vadd.f32 %v1817, 1e-05
    %v1820 = vrsqrt.pop %v1818
    %v1821 = vrsqrt.pop %v1819
    %v1822 = vmul.f32 %v1806, %v1820
    %v1823 = vmul.f32 %v1807, %v1821
    %v1824 = vlaneseq
    %v1825 = vshrl.u32 %v1824, 7
    %v1826 = vsub.s32 0, %v1825
    %v1827 = vrot.slane %v1796, %v1826
    %v1828 = vmul.f32 %v1822, %v1827
    %v1829 = vmul.f32 %v1823, %v1827
    %v1830 = vlaneseq
    %v1831 = vshrl.u32 %v1830, 7
    %v1832 = vsub.s32 0, %v1831
    %v1833 = vrot.slane %v1797, %v1832
    %v1834 = vadd.f32 %v1828, %v1833
    %v1835 = vadd.f32 %v1829, %v1833
    %v1836 = vpack.c.bf16 %v1835, %v1834
    %v1837 = vld [vmem:[#allocation8 + $0x16c] sm:$0xf]
    %v1838 = vld [vmem:[#allocation8 + $0x178] sm:$0xf]
    %v1839 = vld [vmem:[#allocation8 + $0x184] sm:$0xf]
    %v1840 = vld [vmem:[#allocation8 + $0x190] sm:$0xf]
    %v1841 = vld [vmem:[#allocation9 + $0x1d] sm:$0x1]
    %v1842 = vlaneseq
    %v1843 = vshrl.u32 %v1842, 7
    %v1844 = vsub.s32 0, %v1843
    %v1845 = vrot.slane %v1841, %v1844
    %v1850 = vunpack.c.l.b16 %v1837
    %v1851 = vunpack.c.l.b16 %v1838
    %v1852 = vunpack.c.l.b16 %v1839
    %v1853 = vunpack.c.l.b16 %v1840
    %v1854 = vpack.c.b16 %v1851, %v1850
    %v1855 = vpack.c.b16 %v1853, %v1852
    %v1859 = vsel %vm334, %v1836, 0
    %1861 = vmatprep.subr.bf16.mxu0 0
    %1862 = vmatpush1.bf16.msra.mxu0 0
    %1863 = vmatprep.subr.bf16.mxu0 0
    %1864 = vmatpush1.bf16.msra.mxu0 0
    %1865 = vmatprep.subr.bf16.mxu0 0
    %1866 = vmatpush1.bf16.msra.mxu0 0
    %1867 = vmatprep.subr.bf16.mxu0 0
    %1868 = vmatpush1.bf16.msra.mxu0 0
    %1869 = vmatprep.subr.bf16.mxu0 0
    %1870 = vmatpush1.bf16.msra.mxu0 0
    %1871 = vmatprep.subr.bf16.mxu0 0
    %1872 = vmatpush1.bf16.msra.mxu0 0
    %1873 = vmatprep.subr.bf16.mxu0 0
    %1874 = vmatpush1.bf16.msra.mxu0 %v1855
    %1875 = vmatprep.subr.bf16.mxu0 0
    %1876 = vmatpush1.bf16.msra.mxu0 %v1854
    %1877 = vmatprep.subr.bf16.mxu0 0
    %1878 = vmatpush2.bf16.msra.mxu0 0
    %1879 = vmatprep.subr.bf16.mxu0 0
    %1880 = vmatpush2.bf16.msra.mxu0 0
    %1881 = vmatprep.subr.bf16.mxu0 0
    %1882 = vmatpush2.bf16.msra.mxu0 0
    %1883 = vmatprep.subr.bf16.mxu0 0
    %1884 = vmatpush2.bf16.msra.mxu0 0
    %1885 = vmatprep.subr.bf16.mxu0 0
    %1886 = vmatpush2.bf16.msra.mxu0 0
    %1887 = vmatprep.subr.bf16.mxu0 0
    %1888 = vmatpush2.bf16.msra.mxu0 0
    %1889 = vmatprep.subr.bf16.mxu0 0
    %1890 = vmatpush2.bf16.msra.mxu0 0
    %1891 = vmatprep.subr.bf16.mxu0 0
    %1892 = vmatpush2.bf16.msra.mxu0 0
    %1893 = vmatprep.mubr.bf16.mxu0 0
    %1894 = vmatmul.mubr.bf16.gmra.mxu0 %v1859
    %v1895 = vpop.f32.mrf.mxu0
    %v1896 = vadd.f32 %v1845, %v1895
    %v1897 = vpop.f32.mrf.mxu0
    %v1898 = vpop.f32.mrf.mxu0
    %v1899 = vadd.f32 %v1845, %v1898
    %v1900 = vpop.f32.mrf.mxu0
    %1901 = vdwg.mxu0
    %v1902 = vmul.f32 %v1896, %v1896
    %v1903 = vmul.f32 %v1899, %v1899
    %v1904 = vmul.f32 %v1896, %v1902
    %v1905 = vmul.f32 %v1899, %v1903
    %v1906 = vmul.f32 %v1904, 0.044715
    %v1907 = vmul.f32 %v1905, 0.044715
    %v1908 = vadd.f32 %v1896, %v1906
    %v1909 = vadd.f32 %v1899, %v1907
    %v1910 = vmul.f32 %v1908, 0.7978846
    %v1911 = vmul.f32 %v1909, 0.7978846
    %v1912 = vtanh.pop %v1910
    %v1913 = vtanh.pop %v1911
    %v1914 = vadd.f32 %v1912, 1.0
    %v1915 = vadd.f32 %v1913, 1.0
    %v1916 = vmul.f32 %v1914, 0.5
    %v1917 = vmul.f32 %v1915, 0.5
    %v1918 = vmul.f32 %v1896, %v1916
    %v1919 = vmul.f32 %v1899, %v1917
    %v1920 = vpack.c.bf16 %v1919, %v1918
    %v1921 = vld [vmem:[#allocation8 + $0x170] sm:$0xf]
    %v1922 = vld [vmem:[#allocation8 + $0x17c] sm:$0xf]
    %v1923 = vld [vmem:[#allocation8 + $0x188] sm:$0xf]
    %v1924 = vld [vmem:[#allocation8 + $0x194] sm:$0xf]
    %v1929 = vunpack.c.l.b16 %v1921
    %v1930 = vunpack.c.l.b16 %v1922
    %v1931 = vunpack.c.l.b16 %v1923
    %v1932 = vunpack.c.l.b16 %v1924
    %v1933 = vpack.c.b16 %v1930, %v1929
    %v1934 = vpack.c.b16 %v1932, %v1931
    %1937 = vmatprep.subr.bf16.mxu0 0
    %1938 = vmatpush1.bf16.xpose.msra.mxu0 0
    %1939 = vmatprep.subr.bf16.mxu0 0
    %1940 = vmatpush1.bf16.xpose.msra.mxu0 0
    %1941 = vmatprep.subr.bf16.mxu0 0
    %1942 = vmatpush1.bf16.xpose.msra.mxu0 0
    %1943 = vmatprep.subr.bf16.mxu0 0
    %1944 = vmatpush1.bf16.xpose.msra.mxu0 0
    %1945 = vmatprep.subr.bf16.mxu0 0
    %1946 = vmatpush1.bf16.xpose.msra.mxu0 0
    %1947 = vmatprep.subr.bf16.mxu0 0
    %1948 = vmatpush1.bf16.xpose.msra.mxu0 0
    %1949 = vmatprep.subr.bf16.mxu0 0
    %1950 = vmatpush1.bf16.xpose.msra.mxu0 %v1934
    %1951 = vmatprep.subr.bf16.mxu0 0
    %1952 = vmatpush1.bf16.xpose.msra.mxu0 %v1933
    %1953 = vmatprep.subr.bf16.mxu0 0
    %1954 = vmatpush2.bf16.xpose.msra.mxu0 0
    %1955 = vmatprep.subr.bf16.mxu0 0
    %1956 = vmatpush2.bf16.xpose.msra.mxu0 0
    %1957 = vmatprep.subr.bf16.mxu0 0
    %1958 = vmatpush2.bf16.xpose.msra.mxu0 0
    %1959 = vmatprep.subr.bf16.mxu0 0
    %1960 = vmatpush2.bf16.xpose.msra.mxu0 0
    %1961 = vmatprep.subr.bf16.mxu0 0
    %1962 = vmatpush2.bf16.xpose.msra.mxu0 0
    %1963 = vmatprep.subr.bf16.mxu0 0
    %1964 = vmatpush2.bf16.xpose.msra.mxu0 0
    %1965 = vmatprep.subr.bf16.mxu0 0
    %1966 = vmatpush2.bf16.xpose.msra.mxu0 0
    %1967 = vmatprep.subr.bf16.mxu0 0
    %1968 = vmatpush2.bf16.xpose.msra.mxu0 0
    %1969 = vmatprep.mubr.bf16.mxu0 0
    %1970 = vmatmul.mubr.bf16.gmra.mxu0 %v1920
    %v1971 = vpop.f32.mrf.mxu0
    %v1972 = vadd.f32 0.0, %v1971
    %v1973 = vpop.f32.mrf.mxu0
    %v1974 = vpop.f32.mrf.mxu0
    %v1975 = vadd.f32 0.0, %v1974
    %v1976 = vpop.f32.mrf.mxu0
    %1977 = vdwg.mxu0
    %v1978 = vadd.f32 %v1794, %v1972
    %v1979 = vadd.f32 %v1795, %v1975
    %v1980 = vld [vmem:[#allocation9 + $0x15] sm:$0x1]
    %v1981 = vlaneseq
    %v1982 = vshrl.u32 %v1981, 7
    %v1983 = vsub.s32 0, %v1982
    %v1984 = vrot.slane %v1980, %v1983
    %v1985 = vadd.f32 %v1978, %v1984
    %v1986 = vadd.f32 %v1979, %v1984
    %v1987 = vld [vmem:[#allocation9 + $0x3] sm:$0x1]
    %v1988 = vld [vmem:[#allocation9 + $0x7] sm:$0x1]
    %v1989 = vsel %vm334, %v1985, 0.0
    %1990 = vadd.xlane.f32.xlu0 %v1989
    %v1991 = vpop.xlane.xlu0 %1990
    %v1992 = vsel %vm334, %v1986, 0.0
    %1993 = vadd.xlane.f32.xlu0 %v1992
    %v1994 = vpop.xlane.xlu0 %1993
    %v1995 = vmul.f32 %v1991, %v341
    %v1996 = vmul.f32 %v1994, %v341
    %v1997 = vsub.f32 %v1985, %v1995
    %v1998 = vsub.f32 %v1986, %v1996
    %v1999 = vmul.f32 %v1997, %v1997
    %v2000 = vmul.f32 %v1998, %v1998
    %v2001 = vsel %vm334, %v1999, 0.0
    %2002 = vadd.xlane.f32.xlu0 %v2001
    %v2003 = vpop.xlane.xlu0 %2002
    %v2004 = vsel %vm334, %v2000, 0.0
    %2005 = vadd.xlane.f32.xlu0 %v2004
    %v2006 = vpop.xlane.xlu0 %2005
    %v2007 = vmul.f32 %v2003, %v341
    %v2008 = vmul.f32 %v2006, %v341
    %v2009 = vadd.f32 %v2007, 1e-05
    %v2010 = vadd.f32 %v2008, 1e-05
    %v2011 = vrsqrt.pop %v2009
    %v2012 = vrsqrt.pop %v2010
    %v2013 = vmul.f32 %v1997, %v2011
    %v2014 = vmul.f32 %v1998, %v2012
    %v2015 = vlaneseq
    %v2016 = vshrl.u32 %v2015, 7
    %v2017 = vsub.s32 0, %v2016
    %v2018 = vrot.slane %v1987, %v2017
    %v2019 = vmul.f32 %v2013, %v2018
    %v2020 = vmul.f32 %v2014, %v2018
    %v2021 = vlaneseq
    %v2022 = vshrl.u32 %v2021, 7
    %v2023 = vsub.s32 0, %v2022
    %v2024 = vrot.slane %v1988, %v2023
    %v2025 = vadd.f32 %v2019, %v2024
    %v2026 = vadd.f32 %v2020, %v2024
    %v2027 = vpack.c.bf16 %v2026, %v2025
    %v2028 = vld [vmem:[#allocation8 + $0x198] sm:$0xf]
    %v2029 = vld [vmem:[#allocation8 + $0x1a4] sm:$0xf]
    %v2030 = vld [vmem:[#allocation8 + $0x1b0] sm:$0xf]
    %v2031 = vld [vmem:[#allocation8 + $0x1bc] sm:$0xf]
    %v2032 = vld [vmem:[#allocation9 + $0xb] sm:$0x1]
    %v2033 = vlaneseq
    %v2034 = vshrl.u32 %v2033, 7
    %v2035 = vsub.s32 0, %v2034
    %v2036 = vrot.slane %v2032, %v2035
    %v2041 = vunpack.c.l.b16 %v2028
    %v2042 = vunpack.c.l.b16 %v2029
    %v2043 = vunpack.c.l.b16 %v2030
    %v2044 = vunpack.c.l.b16 %v2031
    %v2045 = vpack.c.b16 %v2042, %v2041
    %v2046 = vpack.c.b16 %v2044, %v2043
    %v2050 = vsel %vm334, %v2027, 0
    %2052 = vmatprep.subr.bf16.mxu0 0
    %2053 = vmatpush1.bf16.msra.mxu0 0
    %2054 = vmatprep.subr.bf16.mxu0 0
    %2055 = vmatpush1.bf16.msra.mxu0 0
    %2056 = vmatprep.subr.bf16.mxu0 0
    %2057 = vmatpush1.bf16.msra.mxu0 0
    %2058 = vmatprep.subr.bf16.mxu0 0
    %2059 = vmatpush1.bf16.msra.mxu0 0
    %2060 = vmatprep.subr.bf16.mxu0 0
    %2061 = vmatpush1.bf16.msra.mxu0 0
    %2062 = vmatprep.subr.bf16.mxu0 0
    %2063 = vmatpush1.bf16.msra.mxu0 0
    %2064 = vmatprep.subr.bf16.mxu0 0
    %2065 = vmatpush1.bf16.msra.mxu0 %v2046
    %2066 = vmatprep.subr.bf16.mxu0 0
    %2067 = vmatpush1.bf16.msra.mxu0 %v2045
    %2068 = vmatprep.subr.bf16.mxu0 0
    %2069 = vmatpush2.bf16.msra.mxu0 0
    %2070 = vmatprep.subr.bf16.mxu0 0
    %2071 = vmatpush2.bf16.msra.mxu0 0
    %2072 = vmatprep.subr.bf16.mxu0 0
    %2073 = vmatpush2.bf16.msra.mxu0 0
    %2074 = vmatprep.subr.bf16.mxu0 0
    %2075 = vmatpush2.bf16.msra.mxu0 0
    %2076 = vmatprep.subr.bf16.mxu0 0
    %2077 = vmatpush2.bf16.msra.mxu0 0
    %2078 = vmatprep.subr.bf16.mxu0 0
    %2079 = vmatpush2.bf16.msra.mxu0 0
    %2080 = vmatprep.subr.bf16.mxu0 0
    %2081 = vmatpush2.bf16.msra.mxu0 0
    %2082 = vmatprep.subr.bf16.mxu0 0
    %2083 = vmatpush2.bf16.msra.mxu0 0
    %2084 = vmatprep.mubr.bf16.mxu0 0
    %2085 = vmatmul.mubr.bf16.gmra.mxu0 %v2050
    %v2086 = vpop.f32.mrf.mxu0
    %v2087 = vadd.f32 %v2036, %v2086
    %v2088 = vpop.f32.mrf.mxu0
    %v2089 = vpop.f32.mrf.mxu0
    %v2090 = vadd.f32 %v2036, %v2089
    %v2091 = vpop.f32.mrf.mxu0
    %2092 = vdwg.mxu0
    %v2093 = vpack.c.bf16 %v323, %v323
    %v2094 = vld [vmem:[#allocation8 + $0x1c8] sm:$0xf]
    %v2095 = vld [vmem:[#allocation8 + $0x1d4] sm:$0xf]
    %v2096 = vld [vmem:[#allocation8 + $0x1e0] sm:$0xf]
    %v2097 = vld [vmem:[#allocation8 + $0x1ec] sm:$0xf]
    %v2102 = vunpack.c.l.b16 %v2094
    %v2103 = vunpack.c.l.b16 %v2095
    %v2104 = vunpack.c.l.b16 %v2096
    %v2105 = vunpack.c.l.b16 %v2097
    %v2106 = vpack.c.b16 %v2103, %v2102
    %v2107 = vpack.c.b16 %v2105, %v2104
    %v2111 = vsel %vm334, %v2093, 0
    %2113 = vmatprep.subr.bf16.mxu0 0
    %2114 = vmatpush1.bf16.msra.mxu0 0
    %2115 = vmatprep.subr.bf16.mxu0 0
    %2116 = vmatpush1.bf16.msra.mxu0 0
    %2117 = vmatprep.subr.bf16.mxu0 0
    %2118 = vmatpush1.bf16.msra.mxu0 0
    %2119 = vmatprep.subr.bf16.mxu0 0
    %2120 = vmatpush1.bf16.msra.mxu0 0
    %2121 = vmatprep.subr.bf16.mxu0 0
    %2122 = vmatpush1.bf16.msra.mxu0 0
    %2123 = vmatprep.subr.bf16.mxu0 0
    %2124 = vmatpush1.bf16.msra.mxu0 0
    %2125 = vmatprep.subr.bf16.mxu0 0
    %2126 = vmatpush1.bf16.msra.mxu0 %v2107
    %2127 = vmatprep.subr.bf16.mxu0 0
    %2128 = vmatpush1.bf16.msra.mxu0 %v2106
    %2129 = vmatprep.subr.bf16.mxu0 0
    %2130 = vmatpush2.bf16.msra.mxu0 0
    %2131 = vmatprep.subr.bf16.mxu0 0
    %2132 = vmatpush2.bf16.msra.mxu0 0
    %2133 = vmatprep.subr.bf16.mxu0 0
    %2134 = vmatpush2.bf16.msra.mxu0 0
    %2135 = vmatprep.subr.bf16.mxu0 0
    %2136 = vmatpush2.bf16.msra.mxu0 0
    %2137 = vmatprep.subr.bf16.mxu0 0
    %2138 = vmatpush2.bf16.msra.mxu0 0
    %2139 = vmatprep.subr.bf16.mxu0 0
    %2140 = vmatpush2.bf16.msra.mxu0 0
    %2141 = vmatprep.subr.bf16.mxu0 0
    %2142 = vmatpush2.bf16.msra.mxu0 0
    %2143 = vmatprep.subr.bf16.mxu0 0
    %2144 = vmatpush2.bf16.msra.mxu0 0
    %2145 = vmatprep.mubr.bf16.mxu0 0
    %2146 = vmatmul.mubr.bf16.gmra.mxu0 %v2111
    %v2147 = vpop.f32.mrf.mxu0
    %v2148 = vadd.f32 0.0, %v2147
    %v2149 = vpop.f32.mrf.mxu0
    %v2150 = vpop.f32.mrf.mxu0
    %v2151 = vpop.f32.mrf.mxu0
    %2152 = vdwg.mxu0
    %v2155 = vunpack.c.l.s4 1966171168
    %v2156 = vunpack.c.0.s8 %v2155
    %v2157 = vlaneseq
    %v2158 = vshrl.u32 %v2157, 7
    %v2159 = vsub.s32 %v2156, %v2158
    %v2160 = vrot.slane %v2148, %v2159
    %v2161 = vcombine.high %v2160, %v2160
    %v2163 = vunpack.c.l.s4 1966171168
    %v2164 = vunpack.c.0.s8 %v2163
    %v2165 = vlaneseq
    %v2166 = vshrl.u32 %v2165, 7
    %v2167 = vsub.s32 %v2164, %v2166
    %v2168 = vrot.slane %v2160, %v2167
    %v2170 = vunpack.c.l.s4 1966171168
    %v2171 = vunpack.c.0.s8 %v2170
    %v2172 = vlaneseq
    %v2173 = vshrl.u32 %v2172, 7
    %v2174 = vsub.s32 %v2171, %v2173
    %v2175 = vrot.slane %v2161, %v2174
    %v2176 = vlaneseq
    %v2177 = vshrl.u32 %v2176, 7
    %v2178 = vsub.s32 0, %v2177
    %v2179 = vrot.slane %v2168, %v2178
    %v2180 = vlaneseq
    %v2181 = vshrl.u32 %v2180, 7
    %v2182 = vsub.s32 0, %v2181
    %v2183 = vrot.slane %v2175, %v2182
    %v2186 = vadd.f32 %v2087, %v2179
    %v2187 = vadd.f32 %v2090, %v2183
    %2188 = vst [vmem:[#allocation11] sm:$0xff] %v2186
    %2189 = vst [vmem:[#allocation11 + $0x8] sm:$0xff] %v2187
    // Predicated region
    $region38: #{tpu_custom_call.1} parent=1 // pred_check
      _
    $region39: #{tpu_custom_call.1} parent=1 // pred_check_branch
      %2191 = sbr.rel (0) target = $region41
    $region40: #{tpu_custom_call.1} parent=1 // pred_region
      %s2193 = ssub.s32 256, 256
      %2194 = vsyncadd [#allocation5], %s2193
      %s2195 = sshll.u32 [#allocation11], 4
      %s2196 = int_to_ptr.vmem [resolvable:$true] %s2195
      %2201 = dma.vmem_to_hbm [thread:$0]  %s2196, 256, %s5, [#allocation5], 128, 128, 8
    $region41: #{tpu_custom_call.1} parent=1 // pred_fallthru
      _
    // Predicated region
    $region42: #{tpu_custom_call.1} parent=1 // pred_check
      _
    $region43: #{tpu_custom_call.1} parent=1 // pred_check_branch
      %2203 = sbr.rel (0) target = $region45
    $region44: #{tpu_custom_call.1} parent=1 // pred_region
      %2204 = dma.done [#allocation5], 256
    $region45: #{tpu_custom_call.1} parent=1 // pred_fallthru
      _
    %2205 = vsyncpa [#allocation4], 1
    %2206 = vsyncpa [#allocation7], 1
    %2207 = vsyncpa [#allocation10], 1
    %2208 = vsyncpa [#allocation5], 1

</llo_original>
